<compile_context>
chip_gen: v6e
topology: v6e:2x2x1
jax: 0.10.0
libtpu: 0.0.40
codegen_flags: <defaults>
</compile_context>

<pallas_src>
import numpy as np
import jax
import jax.numpy as jnp
from jax import lax
from jax.experimental import pallas as pl
from jax.experimental.pallas import tpu as pltpu

EPS = 1e-5


# ----------------------------------------------------------------------------
# Structured operand matrices
# ----------------------------------------------------------------------------
def _interp_matrix_np(n_in, n_out):
    """1-D bilinear resize matrix, align_corners=True (PyTorch nn.Upsample(..., True))."""
    idx = np.arange(n_out, dtype=np.float64)
    src = idx * (n_in - 1) / max(n_out - 1, 1)
    i0 = np.clip(np.floor(src).astype(np.int64), 0, max(n_in - 2, 0))
    frac = src - i0
    a = np.zeros((n_out, n_in), dtype=np.float64)
    rows = np.arange(n_out)
    a[rows, i0] += 1.0 - frac
    a[rows, np.minimum(i0 + 1, n_in - 1)] += frac
    return a.astype(np.float32)


def _conv_planar_weights(w_oihw, w_out):
    """Banded planar weight matrices K_dh (w_out*Cin, w_out*Cout), dh = 0..2.

    K_dh[(j+dw-1)*Cin + c, j*Cout + o] = W[o, c, dh, dw]  (out-of-range j+dw-1 dropped
    == width zero-padding).  Row (dh) zero-padding is handled via zero rows in the slab.
    """
    mats = []
    for dh in range(3):
        k = None
        for dw in range(3):
            band = jnp.eye(w_out, w_out, k=1 - dw, dtype=jnp.float32)
            term = jnp.kron(band, w_oihw[:, :, dh, dw].astype(jnp.float32).T)
            k = term if k is None else k + term
        mats.append(k)
    return jnp.stack(mats)


# ----------------------------------------------------------------------------
# Fused UpBlock forward (single Pallas kernel)
# ----------------------------------------------------------------------------
def up_block_forward(x_nchw, params):
    nb, cin, h, w = x_nchw.shape
    cout = params["w1"].shape[0]
    hu, wu = 2 * h, 2 * w
    B = hu + 2               # per-image block height inside the row-padded planar slabs
    rp = 1 + nb * B          # padded slab rows: 1 leading zero row + nb blocks
    rr = rp - 2              # conv-output rows; valid rows sit at n*B + i (i < hu)
    f32, bf16 = jnp.float32, jnp.bfloat16

    # ---- static, shape-only operands (plain numpy) ----
    ah = _interp_matrix_np(h, hu)                                       # (hu, h)
    aw = _interp_matrix_np(w, wu)                                       # (wu, w)
    # Row-upsample + scatter into the padded slab in one matmul (zero rows -> zero pads).
    ascat = np.zeros((rp, nb * h), np.float32)
    for n in range(nb):
        ascat[1 + n * B: 1 + n * B + hu, n * h: (n + 1) * h] = ah
    awk = np.kron(aw.T, np.eye(cin, dtype=np.float32))                  # (w*cin, wu*cin)
    fold = np.kron(np.ones((wu, 1), np.float32),
                   np.eye(cout, dtype=np.float32))                      # (wu*cout, cout)
    mcol = np.zeros((rr, 1), np.float32)                                # 1.0 on valid rows
    for n in range(nb):
        mcol[n * B: n * B + hu, 0] = 1.0

    # ---- weight-dependent planar operands (built in f32, cast to bf16 at the call) ----
    k1 = _conv_planar_weights(params["w1"], wu)                         # (3, wu*cin, wu*cout)
    k1 = jnp.einsum("ab,dbc->dac", jnp.asarray(awk), k1)                # fold width upsample
    k2 = _conv_planar_weights(params["w2"], wu)                         # (3, wu*cout, wu*cout)
    gbeta = jnp.stack([params["g1"], params["beta1"],
                       params["g2"], params["beta2"]]).astype(f32)      # (4, cout)

    # Planar NHWC input: rows=(n, h_row), cols=(w_col, c).
    x_planar = jnp.transpose(x_nchw, (0, 2, 3, 1)).reshape(nb * h, w * cin)

    inv_m = 1.0 / float(nb * hu * wu)

    def kernel(x_ref, ascat_ref, k1_ref, k2_ref, fold_ref, foldt_ref, mcol_ref, gb_ref,
               o_ref, p1_ref, p2_ref):
        # Bilinear row-upsample + scatter into the row-padded bf16 slab (one matmul).
        p1_ref[...] = jnp.dot(ascat_ref[...], x_ref[...],
                              preferred_element_type=f32).astype(bf16)

        fold_m = fold_ref[...]
        foldt_m = foldt_ref[...]
        mcol_m = mcol_ref[...]

        def conv_bn_relu(p_ref, k_ref, gamma, beta):
            # Conv3x3 (pad=1): 3 banded matmuls over the WHOLE slab (all images at once).
            # Rows at pad positions come out as junk; they are excluded from the BN
            # stats via mcol and never reach the final output.
            y = jnp.dot(p_ref[0:rr, :], k_ref[0], preferred_element_type=f32)
            y = y + jnp.dot(p_ref[1:1 + rr, :], k_ref[1], preferred_element_type=f32)
            y = y + jnp.dot(p_ref[2:2 + rr, :], k_ref[2], preferred_element_type=f32)
            # Single-pass BatchNorm (training-mode batch stats, biased variance) + ReLU.
            # Conv bias skipped: BN's mean subtraction cancels it exactly.
            ym = y * mcol_m
            s_p = jnp.sum(ym, axis=0, keepdims=True)                    # (1, wu*cout)
            ss_p = jnp.sum(ym * y, axis=0, keepdims=True)               # (1, wu*cout)
            mean_c = jnp.dot(s_p, fold_m, preferred_element_type=f32) * inv_m   # (1, cout)
            ex2_c = jnp.dot(ss_p, fold_m, preferred_element_type=f32) * inv_m   # (1, cout)
            var_c = jnp.maximum(ex2_c - mean_c * mean_c, 0.0)
            scale_c = gamma * lax.rsqrt(var_c + EPS)
            shift_c = beta - mean_c * scale_c
            scale_p = jnp.dot(scale_c, foldt_m, preferred_element_type=f32)     # (1, wu*cout)
            shift_p = jnp.dot(shift_c, foldt_m, preferred_element_type=f32)
            return jnp.maximum(y * scale_p + shift_p, 0.0)

        # ---- stage 1 -> bf16 padded slab for stage 2 ----
        h1 = conv_bn_relu(p1_ref, k1_ref, gb_ref[0:1, :], gb_ref[1:2, :])
        p2_ref[1:1 + rr, :] = h1.astype(bf16)
        # (Re-)zero only the pad rows (the bulk store put junk there; last row was never written).
        p2_ref[0:1, :] = jnp.zeros((1, wu * cout), bf16)
        for n in range(nb):
            p2_ref[1 + n * B + hu: 1 + n * B + hu + 2, :] = jnp.zeros((2, wu * cout), bf16)

        # ---- stage 2 -> straight into the output (wrapper slices off pad/junk rows) ----
        h2 = conv_bn_relu(p2_ref, k2_ref, gb_ref[2:3, :], gb_ref[3:4, :])
        o_ref[0:rr, :] = h2
        o_ref[rr:rr + 1, :] = jnp.zeros((1, wu * cout), f32)

    vmem = pl.BlockSpec(memory_space=pltpu.MemorySpace.VMEM)
    out_planar = pl.pallas_call(
        kernel,
        out_shape=jax.ShapeDtypeStruct((nb * B, wu * cout), f32),
        in_specs=[vmem] * 8,
        out_specs=vmem,
        scratch_shapes=[
            pltpu.VMEM((rp, w * cin), bf16),     # stage-1 row-padded planar slab (pre width-upsample)
            pltpu.VMEM((rp, wu * cout), bf16),   # stage-2 row-padded planar slab
        ],
    )(
        x_planar.astype(bf16),
        jnp.asarray(ascat).astype(bf16),
        k1.astype(bf16),
        k2.astype(bf16),
        jnp.asarray(fold),
        jnp.asarray(fold.T),
        jnp.asarray(mcol),
        gbeta,
    )
    # padded planar (nb*B, wu*cout) -> drop pad/junk rows -> NHWC -> NCHW
    return out_planar.reshape(nb, B, wu, cout)[:, :hu].transpose(0, 3, 1, 2)


# ----------------------------------------------------------------------------
# Pure JAX/XLA reference (loose in-script sanity check; kernel matmuls run in bf16)
# ----------------------------------------------------------------------------
def up_block_reference(x_nchw, params):
    n, cin, h, w = x_nchw.shape
    hu, wu = 2 * h, 2 * w
    ah = jnp.asarray(_interp_matrix_np(h, hu))
    aw = jnp.asarray(_interp_matrix_np(w, wu))
    up = jnp.einsum("ih,nchw->nciw", ah, x_nchw)
    up = jnp.einsum("jw,nciw->ncij", aw, up)

    def conv_bn_relu(x, wgt, b, g, beta):
        y = lax.conv_general_dilated(x, wgt, (1, 1), ((1, 1), (1, 1)),
                                     dimension_numbers=("NCHW", "OIHW", "NCHW"))
        y = y + b.reshape(1, -1, 1, 1)
        mean = jnp.mean(y, axis=(0, 2, 3), keepdims=True)
        var = jnp.mean((y - mean) ** 2, axis=(0, 2, 3), keepdims=True)
        yhat = (y - mean) * lax.rsqrt(var + EPS)
        return jnp.maximum(yhat * g.reshape(1, -1, 1, 1) + beta.reshape(1, -1, 1, 1), 0.0)

    h1 = conv_bn_relu(up, params["w1"], params["b1"], params["g1"], params["beta1"])
    return conv_bn_relu(h1, params["w2"], params["b2"], params["g2"], params["beta2"])


# ----------------------------------------------------------------------------
# Main
# ----------------------------------------------------------------------------
if __name__ == "__main__":
    in_channels, out_channels = 4, 8
    N, H, W = 2, 16, 16

    key = jax.random.PRNGKey(0)
    kx, kw1, kb1, kw2, kb2 = jax.random.split(key, 5)

    x = jax.random.normal(kx, (N, in_channels, H, W), dtype=jnp.float32)

    params = {
        # Conv2d(in_channels, out_channels, 3x3, pad=1)
        "w1": 0.1 * jax.random.normal(kw1, (out_channels, in_channels, 3, 3), jnp.float32),
        "b1": 0.1 * jax.random.normal(kb1, (out_channels,), jnp.float32),  # cancelled by BN mean
        # BatchNorm2d(out_channels): default init gamma=1, beta=0 (training-mode stats)
        "g1": jnp.ones((out_channels,), jnp.float32),
        "beta1": jnp.zeros((out_channels,), jnp.float32),
        # Conv2d(out_channels, out_channels, 3x3, pad=1)
        "w2": 0.1 * jax.random.normal(kw2, (out_channels, out_channels, 3, 3), jnp.float32),
        "b2": 0.1 * jax.random.normal(kb2, (out_channels,), jnp.float32),  # cancelled by BN mean
        "g2": jnp.ones((out_channels,), jnp.float32),
        "beta2": jnp.zeros((out_channels,), jnp.float32),
    }

    fwd = jax.jit(up_block_forward)
    y = jax.block_until_ready(fwd(x, params))

    assert y.shape == (N, out_channels, 2 * H, 2 * W), y.shape
    assert bool(jnp.all(jnp.isfinite(y)))
    assert bool(jnp.all(y >= 0.0))  # final ReLU

    # Loose numerical sanity check vs pure-XLA reference (kernel matmuls run in bf16).
    y_ref = jax.jit(up_block_reference)(x, params)
    assert bool(jnp.allclose(y, y_ref, atol=0.15, rtol=0.05)), float(jnp.max(jnp.abs(y - y_ref)))

    print("KERNEL_OK")
</pallas_src>

<mosaic_0001>
module attributes {stable_mosaic.version = 11 : i64} {
  func.func @kernel(%arg0: memref<32x64xbf16, #tpu.memory_space<vmem>>, %arg1: memref<69x32xbf16, #tpu.memory_space<vmem>>, %arg2: memref<3x64x256xbf16, #tpu.memory_space<vmem>>, %arg3: memref<3x256x256xbf16, #tpu.memory_space<vmem>>, %arg4: memref<256x8xf32, #tpu.memory_space<vmem>>, %arg5: memref<8x256xf32, #tpu.memory_space<vmem>>, %arg6: memref<67x1xf32, #tpu.memory_space<vmem>>, %arg7: memref<4x8xf32, #tpu.memory_space<vmem>>, %arg8: memref<68x256xf32, #tpu.memory_space<vmem>>, %arg9: memref<69x64xbf16, #tpu.memory_space<vmem>>, %arg10: memref<69x256xbf16, #tpu.memory_space<vmem>>) attributes {dimension_semantics = [], scalar_prefetch = 0 : i64, scratch_operands = 2 : i64, tpu.core_type = #tpu.core_type<tc>} {
    %c0 = arith.constant 0 : index
    %c0_0 = arith.constant 0 : index
    %0 = vector.load %arg1[%c0, %c0_0] : memref<69x32xbf16, #tpu.memory_space<vmem>>, vector<69x32xbf16>
    %c0_1 = arith.constant 0 : index
    %c0_2 = arith.constant 0 : index
    %1 = vector.load %arg0[%c0_1, %c0_2] : memref<32x64xbf16, #tpu.memory_space<vmem>>, vector<32x64xbf16>
    %cst = arith.constant dense<0.000000e+00> : vector<69x64xf32>
    %2 = tpu.matmul %0, %1, %cst {dimension_numbers = #tpu.dot_dimension_numbers<[1], [0], [0], [1], [0, 0, 1, 1], [], []>} : vector<69x32xbf16>, vector<32x64xbf16>, vector<69x64xf32> -> vector<69x64xf32>
    %3 = arith.truncf %2 : vector<69x64xf32> to vector<69x64xbf16>
    %c0_3 = arith.constant 0 : index
    %c0_4 = arith.constant 0 : index
    %4 = vector.load %arg9[%c0_3, %c0_4] : memref<69x64xbf16, #tpu.memory_space<vmem>>, vector<69x64xbf16>
    tpu.vector_store %arg9[%c0_3, %c0_4], %3 {strides = array<i32>} : memref<69x64xbf16, #tpu.memory_space<vmem>>, vector<69x64xbf16>,
    %c0_5 = arith.constant 0 : index
    %c0_6 = arith.constant 0 : index
    %5 = vector.load %arg4[%c0_5, %c0_6] : memref<256x8xf32, #tpu.memory_space<vmem>>, vector<256x8xf32>
    %c0_7 = arith.constant 0 : index
    %c0_8 = arith.constant 0 : index
    %6 = vector.load %arg5[%c0_7, %c0_8] : memref<8x256xf32, #tpu.memory_space<vmem>>, vector<8x256xf32>
    %c0_9 = arith.constant 0 : index
    %c0_10 = arith.constant 0 : index
    %7 = vector.load %arg6[%c0_9, %c0_10] : memref<67x1xf32, #tpu.memory_space<vmem>>, vector<67x1xf32>
    %c0_11 = arith.constant 0 : index
    %c0_12 = arith.constant 0 : index
    %8 = vector.load %arg7[%c0_11, %c0_12] : memref<4x8xf32, #tpu.memory_space<vmem>>, vector<1x8xf32>
    %c1 = arith.constant 1 : index
    %c0_13 = arith.constant 0 : index
    %9 = vector.load %arg7[%c1, %c0_13] : memref<4x8xf32, #tpu.memory_space<vmem>>, vector<1x8xf32>
    %c0_14 = arith.constant 0 : index
    %c0_15 = arith.constant 0 : index
    %10 = vector.load %arg9[%c0_14, %c0_15] : memref<69x64xbf16, #tpu.memory_space<vmem>>, vector<67x64xbf16>
    %c0_16 = arith.constant 0 : index
    %c0_17 = arith.constant 0 : index
    %c0_18 = arith.constant 0 : index
    %11 = vector.load %arg2[%c0_16, %c0_17, %c0_18] : memref<3x64x256xbf16, #tpu.memory_space<vmem>>, vector<1x64x256xbf16>
    %12 = vector.shape_cast %11 : vector<1x64x256xbf16> to vector<64x256xbf16>
    %cst_19 = arith.constant dense<0.000000e+00> : vector<67x256xf32>
    %13 = tpu.matmul %10, %12, %cst_19 {dimension_numbers = #tpu.dot_dimension_numbers<[1], [0], [0], [1], [0, 0, 1, 1], [], []>} : vector<67x64xbf16>, vector<64x256xbf16>, vector<67x256xf32> -> vector<67x256xf32>
    %c1_20 = arith.constant 1 : index
    %c0_21 = arith.constant 0 : index
    %14 = vector.load %arg9[%c1_20, %c0_21] : memref<69x64xbf16, #tpu.memory_space<vmem>>, vector<67x64xbf16>
    %c1_22 = arith.constant 1 : index
    %c0_23 = arith.constant 0 : index
    %c0_24 = arith.constant 0 : index
    %15 = vector.load %arg2[%c1_22, %c0_23, %c0_24] : memref<3x64x256xbf16, #tpu.memory_space<vmem>>, vector<1x64x256xbf16>
    %16 = vector.shape_cast %15 : vector<1x64x256xbf16> to vector<64x256xbf16>
    %cst_25 = arith.constant dense<0.000000e+00> : vector<67x256xf32>
    %17 = tpu.matmul %14, %16, %cst_25 {dimension_numbers = #tpu.dot_dimension_numbers<[1], [0], [0], [1], [0, 0, 1, 1], [], []>} : vector<67x64xbf16>, vector<64x256xbf16>, vector<67x256xf32> -> vector<67x256xf32>
    %18 = arith.addf %13, %17 : vector<67x256xf32>
    %c2 = arith.constant 2 : index
    %c0_26 = arith.constant 0 : index
    %19 = vector.load %arg9[%c2, %c0_26] : memref<69x64xbf16, #tpu.memory_space<vmem>>, vector<67x64xbf16>
    %c2_27 = arith.constant 2 : index
    %c0_28 = arith.constant 0 : index
    %c0_29 = arith.constant 0 : index
    %20 = vector.load %arg2[%c2_27, %c0_28, %c0_29] : memref<3x64x256xbf16, #tpu.memory_space<vmem>>, vector<1x64x256xbf16>
    %21 = vector.shape_cast %20 : vector<1x64x256xbf16> to vector<64x256xbf16>
    %cst_30 = arith.constant dense<0.000000e+00> : vector<67x256xf32>
    %22 = tpu.matmul %19, %21, %cst_30 {dimension_numbers = #tpu.dot_dimension_numbers<[1], [0], [0], [1], [0, 0, 1, 1], [], []>} : vector<67x64xbf16>, vector<64x256xbf16>, vector<67x256xf32> -> vector<67x256xf32>
    %23 = arith.addf %18, %22 : vector<67x256xf32>
    %24 = vector.broadcast %7 : vector<67x1xf32> to vector<67x256xf32>
    %25 = arith.mulf %23, %24 : vector<67x256xf32>
    %cst_31 = arith.constant dense<0.000000e+00> : vector<256xf32>
    %26 = vector.multi_reduction <add>, %25, %cst_31 [0] : vector<67x256xf32> to vector<256xf32>
    %27 = vector.shape_cast %26 : vector<256xf32> to vector<1x256xf32>
    %28 = arith.mulf %25, %23 : vector<67x256xf32>
    %cst_32 = arith.constant dense<0.000000e+00> : vector<256xf32>
    %29 = vector.multi_reduction <add>, %28, %cst_32 [0] : vector<67x256xf32> to vector<256xf32>
    %30 = vector.shape_cast %29 : vector<256xf32> to vector<1x256xf32>
    %cst_33 = arith.constant dense<0.000000e+00> : vector<1x8xf32>
    %31 = tpu.matmul %27, %5, %cst_33 {dimension_numbers = #tpu.dot_dimension_numbers<[1], [0], [0], [1], [0, 0, 1, 1], [], []>} : vector<1x256xf32>, vector<256x8xf32>, vector<1x8xf32> -> vector<1x8xf32>
    %cst_34 = arith.constant 4.8828125E-4 : f32
    %32 = vector.broadcast %cst_34 : f32 to vector<1x8xf32>
    %33 = arith.mulf %31, %32 : vector<1x8xf32>
    %cst_35 = arith.constant dense<0.000000e+00> : vector<1x8xf32>
    %34 = tpu.matmul %30, %5, %cst_35 {dimension_numbers = #tpu.dot_dimension_numbers<[1], [0], [0], [1], [0, 0, 1, 1], [], []>} : vector<1x256xf32>, vector<256x8xf32>, vector<1x8xf32> -> vector<1x8xf32>
    %cst_36 = arith.constant 4.8828125E-4 : f32
    %35 = vector.broadcast %cst_36 : f32 to vector<1x8xf32>
    %36 = arith.mulf %34, %35 : vector<1x8xf32>
    %37 = arith.mulf %33, %33 : vector<1x8xf32>
    %38 = arith.subf %36, %37 : vector<1x8xf32>
    %cst_37 = arith.constant 0.000000e+00 : f32
    %39 = vector.broadcast %cst_37 : f32 to vector<1x8xf32>
    %40 = arith.maximumf %38, %39 : vector<1x8xf32>
    %cst_38 = arith.constant 9.99999974E-6 : f32
    %41 = vector.broadcast %cst_38 : f32 to vector<1x8xf32>
    %42 = arith.addf %40, %41 : vector<1x8xf32>
    %43 = math.rsqrt %42 : vector<1x8xf32>
    %44 = arith.mulf %8, %43 : vector<1x8xf32>
    %45 = arith.mulf %33, %44 : vector<1x8xf32>
    %46 = arith.subf %9, %45 : vector<1x8xf32>
    %cst_39 = arith.constant dense<0.000000e+00> : vector<1x256xf32>
    %47 = tpu.matmul %44, %6, %cst_39 {dimension_numbers = #tpu.dot_dimension_numbers<[1], [0], [0], [1], [0, 0, 1, 1], [], []>} : vector<1x8xf32>, vector<8x256xf32>, vector<1x256xf32> -> vector<1x256xf32>
    %cst_40 = arith.constant dense<0.000000e+00> : vector<1x256xf32>
    %48 = tpu.matmul %46, %6, %cst_40 {dimension_numbers = #tpu.dot_dimension_numbers<[1], [0], [0], [1], [0, 0, 1, 1], [], []>} : vector<1x8xf32>, vector<8x256xf32>, vector<1x256xf32> -> vector<1x256xf32>
    %49 = vector.broadcast %47 : vector<1x256xf32> to vector<67x256xf32>
    %50 = arith.mulf %23, %49 : vector<67x256xf32>
    %51 = vector.broadcast %48 : vector<1x256xf32> to vector<67x256xf32>
    %52 = arith.addf %50, %51 : vector<67x256xf32>
    %cst_41 = arith.constant 0.000000e+00 : f32
    %53 = vector.broadcast %cst_41 : f32 to vector<67x256xf32>
    %54 = arith.maximumf %52, %53 : vector<67x256xf32>
    %55 = arith.truncf %54 : vector<67x256xf32> to vector<67x256xbf16>
    %c1_42 = arith.constant 1 : index
    %c0_43 = arith.constant 0 : index
    %56 = vector.load %arg10[%c1_42, %c0_43] : memref<69x256xbf16, #tpu.memory_space<vmem>>, vector<67x256xbf16>
    tpu.vector_store %arg10[%c1_42, %c0_43], %55 {strides = array<i32>} : memref<69x256xbf16, #tpu.memory_space<vmem>>, vector<67x256xbf16>,
    %cst_44 = arith.constant 0.000000e+00 : bf16
    %57 = vector.broadcast %cst_44 : bf16 to vector<1x256xbf16>
    %c0_45 = arith.constant 0 : index
    %c0_46 = arith.constant 0 : index
    %58 = vector.load %arg10[%c0_45, %c0_46] : memref<69x256xbf16, #tpu.memory_space<vmem>>, vector<1x256xbf16>
    tpu.vector_store %arg10[%c0_45, %c0_46], %57 {strides = array<i32>} : memref<69x256xbf16, #tpu.memory_space<vmem>>, vector<1x256xbf16>,
    %cst_47 = arith.constant 0.000000e+00 : bf16
    %59 = vector.broadcast %cst_47 : bf16 to vector<2x256xbf16>
    %c33 = arith.constant 33 : index
    %c0_48 = arith.constant 0 : index
    %60 = vector.load %arg10[%c33, %c0_48] : memref<69x256xbf16, #tpu.memory_space<vmem>>, vector<2x256xbf16>
    tpu.vector_store %arg10[%c33, %c0_48], %59 {strides = array<i32>} : memref<69x256xbf16, #tpu.memory_space<vmem>>, vector<2x256xbf16>,
    %cst_49 = arith.constant 0.000000e+00 : bf16
    %61 = vector.broadcast %cst_49 : bf16 to vector<2x256xbf16>
    %c67 = arith.constant 67 : index
    %c0_50 = arith.constant 0 : index
    %62 = vector.load %arg10[%c67, %c0_50] : memref<69x256xbf16, #tpu.memory_space<vmem>>, vector<2x256xbf16>
    tpu.vector_store %arg10[%c67, %c0_50], %61 {strides = array<i32>} : memref<69x256xbf16, #tpu.memory_space<vmem>>, vector<2x256xbf16>,
    %c2_51 = arith.constant 2 : index
    %c0_52 = arith.constant 0 : index
    %63 = vector.load %arg7[%c2_51, %c0_52] : memref<4x8xf32, #tpu.memory_space<vmem>>, vector<1x8xf32>
    %c3 = arith.constant 3 : index
    %c0_53 = arith.constant 0 : index
    %64 = vector.load %arg7[%c3, %c0_53] : memref<4x8xf32, #tpu.memory_space<vmem>>, vector<1x8xf32>
    %c0_54 = arith.constant 0 : index
    %c0_55 = arith.constant 0 : index
    %65 = vector.load %arg10[%c0_54, %c0_55] : memref<69x256xbf16, #tpu.memory_space<vmem>>, vector<67x256xbf16>
    %c0_56 = arith.constant 0 : index
    %c0_57 = arith.constant 0 : index
    %c0_58 = arith.constant 0 : index
    %66 = vector.load %arg3[%c0_56, %c0_57, %c0_58] : memref<3x256x256xbf16, #tpu.memory_space<vmem>>, vector<1x256x256xbf16>
    %67 = vector.shape_cast %66 : vector<1x256x256xbf16> to vector<256x256xbf16>
    %cst_59 = arith.constant dense<0.000000e+00> : vector<67x256xf32>
    %68 = tpu.matmul %65, %67, %cst_59 {dimension_numbers = #tpu.dot_dimension_numbers<[1], [0], [0], [1], [0, 0, 1, 1], [], []>} : vector<67x256xbf16>, vector<256x256xbf16>, vector<67x256xf32> -> vector<67x256xf32>
    %c1_60 = arith.constant 1 : index
    %c0_61 = arith.constant 0 : index
    %69 = vector.load %arg10[%c1_60, %c0_61] : memref<69x256xbf16, #tpu.memory_space<vmem>>, vector<67x256xbf16>
    %c1_62 = arith.constant 1 : index
    %c0_63 = arith.constant 0 : index
    %c0_64 = arith.constant 0 : index
    %70 = vector.load %arg3[%c1_62, %c0_63, %c0_64] : memref<3x256x256xbf16, #tpu.memory_space<vmem>>, vector<1x256x256xbf16>
    %71 = vector.shape_cast %70 : vector<1x256x256xbf16> to vector<256x256xbf16>
    %cst_65 = arith.constant dense<0.000000e+00> : vector<67x256xf32>
    %72 = tpu.matmul %69, %71, %cst_65 {dimension_numbers = #tpu.dot_dimension_numbers<[1], [0], [0], [1], [0, 0, 1, 1], [], []>} : vector<67x256xbf16>, vector<256x256xbf16>, vector<67x256xf32> -> vector<67x256xf32>
    %73 = arith.addf %68, %72 : vector<67x256xf32>
    %c2_66 = arith.constant 2 : index
    %c0_67 = arith.constant 0 : index
    %74 = vector.load %arg10[%c2_66, %c0_67] : memref<69x256xbf16, #tpu.memory_space<vmem>>, vector<67x256xbf16>
    %c2_68 = arith.constant 2 : index
    %c0_69 = arith.constant 0 : index
    %c0_70 = arith.constant 0 : index
    %75 = vector.load %arg3[%c2_68, %c0_69, %c0_70] : memref<3x256x256xbf16, #tpu.memory_space<vmem>>, vector<1x256x256xbf16>
    %76 = vector.shape_cast %75 : vector<1x256x256xbf16> to vector<256x256xbf16>
    %cst_71 = arith.constant dense<0.000000e+00> : vector<67x256xf32>
    %77 = tpu.matmul %74, %76, %cst_71 {dimension_numbers = #tpu.dot_dimension_numbers<[1], [0], [0], [1], [0, 0, 1, 1], [], []>} : vector<67x256xbf16>, vector<256x256xbf16>, vector<67x256xf32> -> vector<67x256xf32>
    %78 = arith.addf %73, %77 : vector<67x256xf32>
    %79 = vector.broadcast %7 : vector<67x1xf32> to vector<67x256xf32>
    %80 = arith.mulf %78, %79 : vector<67x256xf32>
    %cst_72 = arith.constant dense<0.000000e+00> : vector<256xf32>
    %81 = vector.multi_reduction <add>, %80, %cst_72 [0] : vector<67x256xf32> to vector<256xf32>
    %82 = vector.shape_cast %81 : vector<256xf32> to vector<1x256xf32>
    %83 = arith.mulf %80, %78 : vector<67x256xf32>
    %cst_73 = arith.constant dense<0.000000e+00> : vector<256xf32>
    %84 = vector.multi_reduction <add>, %83, %cst_73 [0] : vector<67x256xf32> to vector<256xf32>
    %85 = vector.shape_cast %84 : vector<256xf32> to vector<1x256xf32>
    %cst_74 = arith.constant dense<0.000000e+00> : vector<1x8xf32>
    %86 = tpu.matmul %82, %5, %cst_74 {dimension_numbers = #tpu.dot_dimension_numbers<[1], [0], [0], [1], [0, 0, 1, 1], [], []>} : vector<1x256xf32>, vector<256x8xf32>, vector<1x8xf32> -> vector<1x8xf32>
    %cst_75 = arith.constant 4.8828125E-4 : f32
    %87 = vector.broadcast %cst_75 : f32 to vector<1x8xf32>
    %88 = arith.mulf %86, %87 : vector<1x8xf32>
    %cst_76 = arith.constant dense<0.000000e+00> : vector<1x8xf32>
    %89 = tpu.matmul %85, %5, %cst_76 {dimension_numbers = #tpu.dot_dimension_numbers<[1], [0], [0], [1], [0, 0, 1, 1], [], []>} : vector<1x256xf32>, vector<256x8xf32>, vector<1x8xf32> -> vector<1x8xf32>
    %cst_77 = arith.constant 4.8828125E-4 : f32
    %90 = vector.broadcast %cst_77 : f32 to vector<1x8xf32>
    %91 = arith.mulf %89, %90 : vector<1x8xf32>
    %92 = arith.mulf %88, %88 : vector<1x8xf32>
    %93 = arith.subf %91, %92 : vector<1x8xf32>
    %cst_78 = arith.constant 0.000000e+00 : f32
    %94 = vector.broadcast %cst_78 : f32 to vector<1x8xf32>
    %95 = arith.maximumf %93, %94 : vector<1x8xf32>
    %cst_79 = arith.constant 9.99999974E-6 : f32
    %96 = vector.broadcast %cst_79 : f32 to vector<1x8xf32>
    %97 = arith.addf %95, %96 : vector<1x8xf32>
    %98 = math.rsqrt %97 : vector<1x8xf32>
    %99 = arith.mulf %63, %98 : vector<1x8xf32>
    %100 = arith.mulf %88, %99 : vector<1x8xf32>
    %101 = arith.subf %64, %100 : vector<1x8xf32>
    %cst_80 = arith.constant dense<0.000000e+00> : vector<1x256xf32>
    %102 = tpu.matmul %99, %6, %cst_80 {dimension_numbers = #tpu.dot_dimension_numbers<[1], [0], [0], [1], [0, 0, 1, 1], [], []>} : vector<1x8xf32>, vector<8x256xf32>, vector<1x256xf32> -> vector<1x256xf32>
    %cst_81 = arith.constant dense<0.000000e+00> : vector<1x256xf32>
    %103 = tpu.matmul %101, %6, %cst_81 {dimension_numbers = #tpu.dot_dimension_numbers<[1], [0], [0], [1], [0, 0, 1, 1], [], []>} : vector<1x8xf32>, vector<8x256xf32>, vector<1x256xf32> -> vector<1x256xf32>
    %104 = vector.broadcast %102 : vector<1x256xf32> to vector<67x256xf32>
    %105 = arith.mulf %78, %104 : vector<67x256xf32>
    %106 = vector.broadcast %103 : vector<1x256xf32> to vector<67x256xf32>
    %107 = arith.addf %105, %106 : vector<67x256xf32>
    %cst_82 = arith.constant 0.000000e+00 : f32
    %108 = vector.broadcast %cst_82 : f32 to vector<67x256xf32>
    %109 = arith.maximumf %107, %108 : vector<67x256xf32>
    %c0_83 = arith.constant 0 : index
    %c0_84 = arith.constant 0 : index
    %110 = vector.load %arg8[%c0_83, %c0_84] : memref<68x256xf32, #tpu.memory_space<vmem>>, vector<67x256xf32>
    tpu.vector_store %arg8[%c0_83, %c0_84], %109 {strides = array<i32>} : memref<68x256xf32, #tpu.memory_space<vmem>>, vector<67x256xf32>,
    %cst_85 = arith.constant 0.000000e+00 : f32
    %111 = vector.broadcast %cst_85 : f32 to vector<1x256xf32>
    %c67_86 = arith.constant 67 : index
    %c0_87 = arith.constant 0 : index
    %112 = vector.load %arg8[%c67_86, %c0_87] : memref<68x256xf32, #tpu.memory_space<vmem>>, vector<1x256xf32>
    tpu.vector_store %arg8[%c67_86, %c0_87], %111 {strides = array<i32>} : memref<68x256xf32, #tpu.memory_space<vmem>>, vector<1x256xf32>,
    return
  }
}

</mosaic_0001>

<llo_original>
// kernel: up_block_forward.1
$region0: #{up_block_forward.1}
  #allocation0 [shape = 'u32[]', space=smem, size = 0x4, offset = 0x4, fixed_abs, tag = 'smem constant byte address 0x4 - core index']
  #allocation1 [shape = 'u32[144,128]{1,0:T(1,128)}', space=vmem, size = 0x12000, scoped, tag = 'internal scratch']
  #allocation2 [shape = 'bf16[69,64]{1,0:T(8,128)(2,1)}', space=vmem, size = 0x4800, scoped, tag = 'scratch operand']
  #allocation3 [shape = 'bf16[69,256]{1,0:T(8,128)(2,1)}', space=vmem, size = 0x9000, scoped, tag = 'scratch operand']
  %s0 = inlined_call_operand.vmem [shape: bf16[32,64], index: 0, kind: input, shape index: {}]
  %s1 = inlined_call_operand.vmem [shape: bf16[69,32], index: 1, kind: input, shape index: {}]
  %s2 = inlined_call_operand.vmem [shape: bf16[3,64,256], index: 2, kind: input, shape index: {}]
  %s3 = inlined_call_operand.vmem [shape: bf16[3,256,256], index: 3, kind: input, shape index: {}]
  %s4 = inlined_call_operand.vmem [shape: f32[256,8], index: 4, kind: input, shape index: {}]
  %s5 = inlined_call_operand.vmem [shape: f32[8,256], index: 5, kind: input, shape index: {}]
  %s6 = inlined_call_operand.vmem [shape: f32[67,1], index: 6, kind: input, shape index: {}]
  %s7 = inlined_call_operand.vmem [shape: f32[4,8], index: 7, kind: input, shape index: {}]
  %s8 = inlined_call_operand.vmem [shape: f32[68,256], index: 8, kind: output, shape index: {}]
  %s9 = sld [smem:[#allocation0]]
  $region42: #{up_block_forward.1} parent=0
    _
  %s11 = ssub.s32 1, %s9
  %s12 = scalar_select 0, %s11, %s9
  // Predicated region
  $region2: #{up_block_forward.1} parent=0 // pred_check
    _
  $region3: #{up_block_forward.1} parent=0 // pred_check_branch
    %14 = sbr.rel (0) target = $region5
  $region4: #{up_block_forward.1} parent=0 // pred_region
    _
  $region5: #{up_block_forward.1} parent=0 // pred_fallthru
    _
  // Predicated region
  $region6: #{up_block_forward.1} parent=0 // pred_check
    _
  $region7: #{up_block_forward.1} parent=0 // pred_check_branch
    %16 = sbr.rel (0) target = $region9
  $region8: #{up_block_forward.1} parent=0 // pred_region
    _
  $region9: #{up_block_forward.1} parent=0 // pred_fallthru
    _
  // Predicated region
  $region10: #{up_block_forward.1} parent=0 // pred_check
    _
  $region11: #{up_block_forward.1} parent=0 // pred_check_branch
    %18 = sbr.rel (0) target = $region13
  $region12: #{up_block_forward.1} parent=0 // pred_region
    _
  $region13: #{up_block_forward.1} parent=0 // pred_fallthru
    _
  // Predicated region
  $region14: #{up_block_forward.1} parent=0 // pred_check
    _
  $region15: #{up_block_forward.1} parent=0 // pred_check_branch
    %20 = sbr.rel (0) target = $region17
  $region16: #{up_block_forward.1} parent=0 // pred_region
    _
  $region17: #{up_block_forward.1} parent=0 // pred_fallthru
    _
  // Predicated region
  $region18: #{up_block_forward.1} parent=0 // pred_check
    _
  $region19: #{up_block_forward.1} parent=0 // pred_check_branch
    %22 = sbr.rel (0) target = $region21
  $region20: #{up_block_forward.1} parent=0 // pred_region
    _
  $region21: #{up_block_forward.1} parent=0 // pred_fallthru
    _
  // Predicated region
  $region22: #{up_block_forward.1} parent=0 // pred_check
    _
  $region23: #{up_block_forward.1} parent=0 // pred_check_branch
    %24 = sbr.rel (0) target = $region25
  $region24: #{up_block_forward.1} parent=0 // pred_region
    _
  $region25: #{up_block_forward.1} parent=0 // pred_fallthru
    _
  // Predicated region
  $region26: #{up_block_forward.1} parent=0 // pred_check
    _
  $region27: #{up_block_forward.1} parent=0 // pred_check_branch
    %26 = sbr.rel (0) target = $region29
  $region28: #{up_block_forward.1} parent=0 // pred_region
    _
  $region29: #{up_block_forward.1} parent=0 // pred_fallthru
    _
  // Predicated region
  $region30: #{up_block_forward.1} parent=0 // pred_check
    _
  $region31: #{up_block_forward.1} parent=0 // pred_check_branch
    %28 = sbr.rel (0) target = $region33
  $region32: #{up_block_forward.1} parent=0 // pred_region
    _
  $region33: #{up_block_forward.1} parent=0 // pred_fallthru
    _
  %v30 = vld [vmem:[%s1] sm:$0xf]
  %v31 = vld [vmem:[%s1 + $0x4] sm:$0xf]
  %v32 = vld [vmem:[%s1 + $0x8] sm:$0xf]
  %v33 = vld [vmem:[%s1 + $0xc] sm:$0xf]
  %v34 = vld [vmem:[%s1 + $0x10] sm:$0xf]
  %v35 = vld [vmem:[%s1 + $0x14] sm:$0xf]
  %v36 = vld [vmem:[%s1 + $0x18] sm:$0xf]
  %v37 = vld [vmem:[%s1 + $0x1c] sm:$0xf]
  %v38 = vld [vmem:[%s1 + $0x20] sm:$0x7]
  %v39 = vld [vmem:[%s0] sm:$0xf]
  %v40 = vld [vmem:[%s0 + $0x4] sm:$0xf]
  %v41 = vld [vmem:[%s0 + $0x8] sm:$0xf]
  %v42 = vld [vmem:[%s0 + $0xc] sm:$0xf]
  %v52 = vunpack.c.l.b16 %v30
  %v53 = vunpack.c.l.b16 %v31
  %v54 = vunpack.c.l.b16 %v32
  %v55 = vunpack.c.l.b16 %v33
  %v56 = vunpack.c.l.b16 %v34
  %v57 = vunpack.c.l.b16 %v35
  %v58 = vunpack.c.l.b16 %v36
  %v59 = vunpack.c.l.b16 %v37
  %v60 = vunpack.c.l.b16 %v38
  %v61 = vpack.c.b16 %v53, %v52
  %v62 = vpack.c.b16 %v55, %v54
  %v63 = vpack.c.b16 %v57, %v56
  %v64 = vpack.c.b16 %v59, %v58
  %v65 = vpack.c.b16 %v60, %v60
  %v70 = vunpack.c.l.b16 %v39
  %v71 = vunpack.c.l.b16 %v40
  %v72 = vunpack.c.l.b16 %v41
  %v73 = vunpack.c.l.b16 %v42
  %v74 = vpack.c.b16 %v71, %v70
  %v75 = vpack.c.b16 %v73, %v72
  %vm78 = vcmask 261120
  %v80 = vsel %vm78, %v61, 0
  %v83 = vsel %vm78, %v62, 0
  %v86 = vsel %vm78, %v63, 0
  %v89 = vsel %vm78, %v64, 0
  %v92 = vsel %vm78, %v65, 0
  %94 = vmatprep.subr.bf16.mxu0 0
  %95 = vmatpush1.bf16.msra.mxu0 0
  %96 = vmatprep.subr.bf16.mxu0 0
  %97 = vmatpush1.bf16.msra.mxu0 0
  %98 = vmatprep.subr.bf16.mxu0 0
  %99 = vmatpush1.bf16.msra.mxu0 0
  %100 = vmatprep.subr.bf16.mxu0 0
  %101 = vmatpush1.bf16.msra.mxu0 0
  %102 = vmatprep.subr.bf16.mxu0 0
  %103 = vmatpush1.bf16.msra.mxu0 0
  %104 = vmatprep.subr.bf16.mxu0 0
  %105 = vmatpush1.bf16.msra.mxu0 0
  %106 = vmatprep.subr.bf16.mxu0 0
  %107 = vmatpush1.bf16.msra.mxu0 %v75
  %108 = vmatprep.subr.bf16.mxu0 0
  %109 = vmatpush1.bf16.msra.mxu0 %v74
  %110 = vmatprep.subr.bf16.mxu0 0
  %111 = vmatpush2.bf16.msra.mxu0 0
  %112 = vmatprep.subr.bf16.mxu0 0
  %113 = vmatpush2.bf16.msra.mxu0 0
  %114 = vmatprep.subr.bf16.mxu0 0
  %115 = vmatpush2.bf16.msra.mxu0 0
  %116 = vmatprep.subr.bf16.mxu0 0
  %117 = vmatpush2.bf16.msra.mxu0 0
  %118 = vmatprep.subr.bf16.mxu0 0
  %119 = vmatpush2.bf16.msra.mxu0 0
  %120 = vmatprep.subr.bf16.mxu0 0
  %121 = vmatpush2.bf16.msra.mxu0 0
  %122 = vmatprep.subr.bf16.mxu0 0
  %123 = vmatpush2.bf16.msra.mxu0 0
  %124 = vmatprep.subr.bf16.mxu0 0
  %125 = vmatpush2.bf16.msra.mxu0 0
  %126 = vmatprep.mubr.bf16.mxu0 0
  %127 = vmatmul.mubr.bf16.gmra.mxu0 %v80
  %v128 = vpop.f32.mrf.mxu0
  %v129 = vadd.f32 0.0, %v128
  %v130 = vpop.f32.mrf.mxu0
  %v131 = vpop.f32.mrf.mxu0
  %v132 = vadd.f32 0.0, %v131
  %v133 = vpop.f32.mrf.mxu0
  %134 = vmatprep.mubr.bf16.mxu0 0
  %135 = vmatmul.mubr.bf16.gmra.mxu0 %v83
  %v136 = vpop.f32.mrf.mxu0
  %v137 = vadd.f32 0.0, %v136
  %v138 = vpop.f32.mrf.mxu0
  %v139 = vpop.f32.mrf.mxu0
  %v140 = vadd.f32 0.0, %v139
  %v141 = vpop.f32.mrf.mxu0
  %142 = vmatprep.mubr.bf16.mxu0 0
  %143 = vmatmul.mubr.bf16.gmra.mxu0 %v86
  %v144 = vpop.f32.mrf.mxu0
  %v145 = vadd.f32 0.0, %v144
  %v146 = vpop.f32.mrf.mxu0
  %v147 = vpop.f32.mrf.mxu0
  %v148 = vadd.f32 0.0, %v147
  %v149 = vpop.f32.mrf.mxu0
  %150 = vmatprep.mubr.bf16.mxu0 0
  %151 = vmatmul.mubr.bf16.gmra.mxu0 %v89
  %v152 = vpop.f32.mrf.mxu0
  %v153 = vadd.f32 0.0, %v152
  %v154 = vpop.f32.mrf.mxu0
  %v155 = vpop.f32.mrf.mxu0
  %v156 = vadd.f32 0.0, %v155
  %v157 = vpop.f32.mrf.mxu0
  %158 = vmatprep.mubr.bf16.mxu0 0
  %159 = vmatmul.mubr.bf16.gmra.mxu0 %v92
  %v160 = vpop.f32.mrf.mxu0
  %v161 = vadd.f32 0.0, %v160
  %v162 = vpop.f32.mrf.mxu0
  %v163 = vpop.f32.mrf.mxu0
  %v164 = vpop.f32.mrf.mxu0
  %165 = vdwg.mxu0
  %v166 = vpack.c.bf16 %v132, %v129
  %v167 = vpack.c.bf16 %v140, %v137
  %v168 = vpack.c.bf16 %v148, %v145
  %v169 = vpack.c.bf16 %v156, %v153
  %v170 = vpack.c.bf16 %v161, %v161
  %v176 = vunpack.c.l.b16 %v166
  %v177 = vunpack.c.h.b16 %v166
  %v178 = vunpack.c.l.b16 %v167
  %v179 = vunpack.c.h.b16 %v167
  %v180 = vunpack.c.l.b16 %v168
  %v181 = vunpack.c.h.b16 %v168
  %v182 = vunpack.c.l.b16 %v169
  %v183 = vunpack.c.h.b16 %v169
  %v184 = vunpack.c.l.b16 %v170
  %v185 = vpack.c.b16 %v176, %v176
  %v186 = vpack.c.b16 %v177, %v177
  %v187 = vpack.c.b16 %v178, %v178
  %v188 = vpack.c.b16 %v179, %v179
  %v189 = vpack.c.b16 %v180, %v180
  %v190 = vpack.c.b16 %v181, %v181
  %v191 = vpack.c.b16 %v182, %v182
  %v192 = vpack.c.b16 %v183, %v183
  %v193 = vpack.c.b16 %v184, %v184
  %vm203 = vcmask 519168
  %204 = vst.msk [vmem:[#allocation2] sm:$0xf] %vm203, %v185
  %205 = vst.msk [vmem:[#allocation2 + $0x4] sm:$0xf] %vm203, %v186
  %206 = vst.msk [vmem:[#allocation2 + $0x8] sm:$0xf] %vm203, %v187
  %207 = vst.msk [vmem:[#allocation2 + $0xc] sm:$0xf] %vm203, %v188
  %208 = vst.msk [vmem:[#allocation2 + $0x10] sm:$0xf] %vm203, %v189
  %209 = vst.msk [vmem:[#allocation2 + $0x14] sm:$0xf] %vm203, %v190
  %210 = vst.msk [vmem:[#allocation2 + $0x18] sm:$0xf] %vm203, %v191
  %211 = vst.msk [vmem:[#allocation2 + $0x1c] sm:$0xf] %vm203, %v192
  %vm212 = vcmask 518144
  %vm213 = vsmask.f32 2304
  %vm214 = vmand %vm212, %vm213
  %v215 = vld [vmem:[#allocation2 + $0x20] sm:$0x7]
  %v216 = vsel %vm214, %v193, %v215
  %217 = vst [vmem:[#allocation2 + $0x20] sm:$0x7] %v216
  %v218 = vld [vmem:[%s4] sm:$0xff]
  %v219 = vld [vmem:[%s4 + $0x8] sm:$0xff]
  %v220 = vld [vmem:[%s4 + $0x10] sm:$0xff]
  %v221 = vld [vmem:[%s4 + $0x18] sm:$0xff]
  %v222 = vld [vmem:[%s4 + $0x20] sm:$0xff]
  %v223 = vld [vmem:[%s4 + $0x28] sm:$0xff]
  %v224 = vld [vmem:[%s4 + $0x30] sm:$0xff]
  %v225 = vld [vmem:[%s4 + $0x38] sm:$0xff]
  %v226 = vld [vmem:[%s4 + $0x40] sm:$0xff]
  %v227 = vld [vmem:[%s4 + $0x48] sm:$0xff]
  %v228 = vld [vmem:[%s4 + $0x50] sm:$0xff]
  %v229 = vld [vmem:[%s4 + $0x58] sm:$0xff]
  %v230 = vld [vmem:[%s4 + $0x60] sm:$0xff]
  %v231 = vld [vmem:[%s4 + $0x68] sm:$0xff]
  %v232 = vld [vmem:[%s4 + $0x70] sm:$0xff]
  %v233 = vld [vmem:[%s4 + $0x78] sm:$0xff]
  %v234 = vld [vmem:[%s4 + $0x80] sm:$0xff]
  %v235 = vld [vmem:[%s4 + $0x88] sm:$0xff]
  %v236 = vld [vmem:[%s4 + $0x90] sm:$0xff]
  %v237 = vld [vmem:[%s4 + $0x98] sm:$0xff]
  %v238 = vld [vmem:[%s4 + $0xa0] sm:$0xff]
  %v239 = vld [vmem:[%s4 + $0xa8] sm:$0xff]
  %v240 = vld [vmem:[%s4 + $0xb0] sm:$0xff]
  %v241 = vld [vmem:[%s4 + $0xb8] sm:$0xff]
  %v242 = vld [vmem:[%s4 + $0xc0] sm:$0xff]
  %v243 = vld [vmem:[%s4 + $0xc8] sm:$0xff]
  %v244 = vld [vmem:[%s4 + $0xd0] sm:$0xff]
  %v245 = vld [vmem:[%s4 + $0xd8] sm:$0xff]
  %v246 = vld [vmem:[%s4 + $0xe0] sm:$0xff]
  %v247 = vld [vmem:[%s4 + $0xe8] sm:$0xff]
  %v248 = vld [vmem:[%s4 + $0xf0] sm:$0xff]
  %v249 = vld [vmem:[%s4 + $0xf8] sm:$0xff]
  %v250 = vld [vmem:[%s5] sm:$0xff]
  %v251 = vld [vmem:[%s5 + $0x8] sm:$0xff]
  %v252 = vld [vmem:[%s6] sm:$0xff]
  %v253 = vld [vmem:[%s6 + $0x8] sm:$0xff]
  %v254 = vld [vmem:[%s6 + $0x10] sm:$0xff]
  %v255 = vld [vmem:[%s6 + $0x18] sm:$0xff]
  %v256 = vld [vmem:[%s6 + $0x20] sm:$0xff]
  %v257 = vld [vmem:[%s6 + $0x28] sm:$0xff]
  %v258 = vld [vmem:[%s6 + $0x30] sm:$0xff]
  %v259 = vld [vmem:[%s6 + $0x38] sm:$0xff]
  %v260 = vld [vmem:[%s6 + $0x40] sm:$0x7]
  %v261 = vld [vmem:[%s7] sm:$0x1]
  %v262 = vld [vmem:[%s7 + $0x1] sm:$0x1]
  %v263 = vld [vmem:[#allocation2] sm:$0xf]
  %v264 = vld [vmem:[#allocation2 + $0x4] sm:$0xf]
  %v265 = vld [vmem:[#allocation2 + $0x8] sm:$0xf]
  %v266 = vld [vmem:[#allocation2 + $0xc] sm:$0xf]
  %v267 = vld [vmem:[#allocation2 + $0x10] sm:$0xf]
  %v268 = vld [vmem:[#allocation2 + $0x14] sm:$0xf]
  %v269 = vld [vmem:[#allocation2 + $0x18] sm:$0xf]
  %v270 = vld [vmem:[#allocation2 + $0x1c] sm:$0xf]
  %v271 = vld [vmem:[#allocation2 + $0x20] sm:$0x3]
  %v272 = vld [vmem:[%s2] sm:$0xff]
  %v273 = vld [vmem:[%s2 + $0x8] sm:$0xff]
  %v274 = vld [vmem:[%s2 + $0x10] sm:$0xff]
  %v275 = vld [vmem:[%s2 + $0x18] sm:$0xff]
  %v276 = vld [vmem:[%s2 + $0x20] sm:$0xff]
  %v277 = vld [vmem:[%s2 + $0x28] sm:$0xff]
  %v278 = vld [vmem:[%s2 + $0x30] sm:$0xff]
  %v279 = vld [vmem:[%s2 + $0x38] sm:$0xff]
  %s280 = scalar_lea.vmem %s2, 64
  %v281 = vld [vmem:[%s280] sm:$0xff]
  %v282 = vld [vmem:[%s280 + $0x8] sm:$0xff]
  %v283 = vld [vmem:[%s280 + $0x10] sm:$0xff]
  %v284 = vld [vmem:[%s280 + $0x18] sm:$0xff]
  %v285 = vld [vmem:[%s280 + $0x20] sm:$0xff]
  %v286 = vld [vmem:[%s280 + $0x28] sm:$0xff]
  %v287 = vld [vmem:[%s280 + $0x30] sm:$0xff]
  %v288 = vld [vmem:[%s280 + $0x38] sm:$0xff]
  %v298 = vunpack.c.l.b16 %v263
  %v299 = vunpack.c.l.b16 %v264
  %v300 = vunpack.c.l.b16 %v265
  %v301 = vunpack.c.l.b16 %v266
  %v302 = vunpack.c.l.b16 %v267
  %v303 = vunpack.c.l.b16 %v268
  %v304 = vunpack.c.l.b16 %v269
  %v305 = vunpack.c.l.b16 %v270
  %v306 = vunpack.c.l.b16 %v271
  %v307 = vpack.c.b16 %v299, %v298
  %v308 = vpack.c.b16 %v301, %v300
  %v309 = vpack.c.b16 %v303, %v302
  %v310 = vpack.c.b16 %v305, %v304
  %v311 = vpack.c.b16 %v306, %v306
  %vm312 = vsmask.f32 7424
  %v314 = vshrl.u32 %v307, 16
  %v316 = vshll.u32 %v307, 16
  %v318 = vrot.slane %v316, 1
  %v319 = vor.u32 %v314, %v318
  %v321 = vshll.u32 %v308, 16
  %v323 = vrot.slane %v321, 1
  %v324 = vsel %vm312, %v319, %v323
  %v325 = vshrl.u32 %v308, 16
  %v327 = vor.u32 %v325, %v323
  %v329 = vshll.u32 %v309, 16
  %v331 = vrot.slane %v329, 1
  %v332 = vsel %vm312, %v327, %v331
  %v333 = vshrl.u32 %v309, 16
  %v335 = vor.u32 %v333, %v331
  %v337 = vshll.u32 %v310, 16
  %v339 = vrot.slane %v337, 1
  %v340 = vsel %vm312, %v335, %v339
  %v341 = vshrl.u32 %v310, 16
  %v343 = vor.u32 %v341, %v339
  %v345 = vshll.u32 %v311, 16
  %v347 = vrot.slane %v345, 1
  %v348 = vsel %vm312, %v343, %v347
  %v349 = vshrl.u32 %v311, 16
  %v351 = vor.u32 %v349, %v347
  %v360 = vunpack.c.l.b16 %v281
  %v361 = vunpack.c.h.b16 %v281
  %v362 = vunpack.c.l.b16 %v282
  %v363 = vunpack.c.h.b16 %v282
  %v364 = vunpack.c.l.b16 %v283
  %v365 = vunpack.c.h.b16 %v283
  %v366 = vunpack.c.l.b16 %v284
  %v367 = vunpack.c.h.b16 %v284
  %v368 = vunpack.c.l.b16 %v285
  %v369 = vunpack.c.h.b16 %v285
  %v370 = vunpack.c.l.b16 %v286
  %v371 = vunpack.c.h.b16 %v286
  %v372 = vunpack.c.l.b16 %v287
  %v373 = vunpack.c.h.b16 %v287
  %v374 = vunpack.c.l.b16 %v288
  %v375 = vunpack.c.h.b16 %v288
  %v376 = vpack.c.b16 %v362, %v360
  %v377 = vpack.c.b16 %v363, %v361
  %v378 = vpack.c.b16 %v366, %v364
  %v379 = vpack.c.b16 %v367, %v365
  %v380 = vpack.c.b16 %v370, %v368
  %v381 = vpack.c.b16 %v371, %v369
  %v382 = vpack.c.b16 %v374, %v372
  %v383 = vpack.c.b16 %v375, %v373
  %vm392 = vcmask 523264
  %v394 = vsel %vm392, %v324, 0
  %v397 = vsel %vm392, %v332, 0
  %v400 = vsel %vm392, %v340, 0
  %v403 = vsel %vm392, %v348, 0
  %v406 = vsel %vm392, %v351, 0
  %408 = vmatprep.subr.bf16.mxu0 0
  %409 = vmatpush1.bf16.msra.mxu0 0
  %410 = vmatprep.subr.bf16.mxu0 0
  %411 = vmatpush1.bf16.msra.mxu0 0
  %412 = vmatprep.subr.bf16.mxu0 0
  %413 = vmatpush1.bf16.msra.mxu0 0
  %414 = vmatprep.subr.bf16.mxu0 0
  %415 = vmatpush1.bf16.msra.mxu0 0
  %416 = vmatprep.subr.bf16.mxu0 %v383
  %417 = vmatpush1.bf16.msra.mxu0 %v382
  %418 = vmatprep.subr.bf16.mxu0 %v381
  %419 = vmatpush1.bf16.msra.mxu0 %v380
  %420 = vmatprep.subr.bf16.mxu0 %v379
  %421 = vmatpush1.bf16.msra.mxu0 %v378
  %422 = vmatprep.subr.bf16.mxu0 %v377
  %423 = vmatpush1.bf16.msra.mxu0 %v376
  %424 = vmatprep.subr.bf16.mxu0 0
  %425 = vmatpush2.bf16.msra.mxu0 0
  %426 = vmatprep.subr.bf16.mxu0 0
  %427 = vmatpush2.bf16.msra.mxu0 0
  %428 = vmatprep.subr.bf16.mxu0 0
  %429 = vmatpush2.bf16.msra.mxu0 0
  %430 = vmatprep.subr.bf16.mxu0 0
  %431 = vmatpush2.bf16.msra.mxu0 0
  %432 = vmatprep.subr.bf16.mxu0 0
  %433 = vmatpush2.bf16.msra.mxu0 0
  %434 = vmatprep.subr.bf16.mxu0 0
  %435 = vmatpush2.bf16.msra.mxu0 0
  %436 = vmatprep.subr.bf16.mxu0 0
  %437 = vmatpush2.bf16.msra.mxu0 0
  %438 = vmatprep.subr.bf16.mxu0 0
  %439 = vmatpush2.bf16.msra.mxu0 0
  %440 = vmatprep.mubr.bf16.mxu0 0
  %441 = vmatmul.mubr.bf16.gmra.mxu0 %v394
  %v442 = vpop.f32.mrf.mxu0
  %v443 = vadd.f32 0.0, %v442
  %v444 = vpop.f32.mrf.mxu0
  %v445 = vadd.f32 0.0, %v444
  %v446 = vpop.f32.mrf.mxu0
  %v447 = vadd.f32 0.0, %v446
  %v448 = vpop.f32.mrf.mxu0
  %v449 = vadd.f32 0.0, %v448
  %450 = vmatprep.mubr.bf16.mxu0 0
  %451 = vmatmul.mubr.bf16.gmra.mxu0 %v397
  %v452 = vpop.f32.mrf.mxu0
  %v453 = vadd.f32 0.0, %v452
  %v454 = vpop.f32.mrf.mxu0
  %v455 = vadd.f32 0.0, %v454
  %v456 = vpop.f32.mrf.mxu0
  %v457 = vadd.f32 0.0, %v456
  %v458 = vpop.f32.mrf.mxu0
  %v459 = vadd.f32 0.0, %v458
  %460 = vmatprep.mubr.bf16.mxu0 0
  %461 = vmatmul.mubr.bf16.gmra.mxu0 %v400
  %v462 = vpop.f32.mrf.mxu0
  %v463 = vadd.f32 0.0, %v462
  %v464 = vpop.f32.mrf.mxu0
  %v465 = vadd.f32 0.0, %v464
  %v466 = vpop.f32.mrf.mxu0
  %v467 = vadd.f32 0.0, %v466
  %v468 = vpop.f32.mrf.mxu0
  %v469 = vadd.f32 0.0, %v468
  %470 = vmatprep.mubr.bf16.mxu0 0
  %471 = vmatmul.mubr.bf16.gmra.mxu0 %v403
  %v472 = vpop.f32.mrf.mxu0
  %v473 = vadd.f32 0.0, %v472
  %v474 = vpop.f32.mrf.mxu0
  %v475 = vadd.f32 0.0, %v474
  %v476 = vpop.f32.mrf.mxu0
  %v477 = vadd.f32 0.0, %v476
  %v478 = vpop.f32.mrf.mxu0
  %v479 = vadd.f32 0.0, %v478
  %480 = vmatprep.mubr.bf16.mxu0 0
  %481 = vmatmul.mubr.bf16.gmra.mxu0 %v406
  %v482 = vpop.f32.mrf.mxu0
  %v483 = vadd.f32 0.0, %v482
  %v484 = vpop.f32.mrf.mxu0
  %v485 = vadd.f32 0.0, %v484
  %v486 = vpop.f32.mrf.mxu0
  %v487 = vpop.f32.mrf.mxu0
  %488 = vdwg.mxu0
  %v497 = vunpack.c.l.b16 %v272
  %v498 = vunpack.c.h.b16 %v272
  %v499 = vunpack.c.l.b16 %v273
  %v500 = vunpack.c.h.b16 %v273
  %v501 = vunpack.c.l.b16 %v274
  %v502 = vunpack.c.h.b16 %v274
  %v503 = vunpack.c.l.b16 %v275
  %v504 = vunpack.c.h.b16 %v275
  %v505 = vunpack.c.l.b16 %v276
  %v506 = vunpack.c.h.b16 %v276
  %v507 = vunpack.c.l.b16 %v277
  %v508 = vunpack.c.h.b16 %v277
  %v509 = vunpack.c.l.b16 %v278
  %v510 = vunpack.c.h.b16 %v278
  %v511 = vunpack.c.l.b16 %v279
  %v512 = vunpack.c.h.b16 %v279
  %v513 = vpack.c.b16 %v499, %v497
  %v514 = vpack.c.b16 %v500, %v498
  %v515 = vpack.c.b16 %v503, %v501
  %v516 = vpack.c.b16 %v504, %v502
  %v517 = vpack.c.b16 %v507, %v505
  %v518 = vpack.c.b16 %v508, %v506
  %v519 = vpack.c.b16 %v511, %v509
  %v520 = vpack.c.b16 %v512, %v510
  %v529 = vsel %vm392, %v307, 0
  %v531 = vsel %vm392, %v308, 0
  %v533 = vsel %vm392, %v309, 0
  %v535 = vsel %vm392, %v310, 0
  %v537 = vsel %vm392, %v311, 0
  %539 = vmatprep.subr.bf16.mxu0 0
  %540 = vmatpush1.bf16.msra.mxu0 0
  %541 = vmatprep.subr.bf16.mxu0 0
  %542 = vmatpush1.bf16.msra.mxu0 0
  %543 = vmatprep.subr.bf16.mxu0 0
  %544 = vmatpush1.bf16.msra.mxu0 0
  %545 = vmatprep.subr.bf16.mxu0 0
  %546 = vmatpush1.bf16.msra.mxu0 0
  %547 = vmatprep.subr.bf16.mxu0 %v520
  %548 = vmatpush1.bf16.msra.mxu0 %v519
  %549 = vmatprep.subr.bf16.mxu0 %v518
  %550 = vmatpush1.bf16.msra.mxu0 %v517
  %551 = vmatprep.subr.bf16.mxu0 %v516
  %552 = vmatpush1.bf16.msra.mxu0 %v515
  %553 = vmatprep.subr.bf16.mxu0 %v514
  %554 = vmatpush1.bf16.msra.mxu0 %v513
  %555 = vmatprep.subr.bf16.mxu0 0
  %556 = vmatpush2.bf16.msra.mxu0 0
  %557 = vmatprep.subr.bf16.mxu0 0
  %558 = vmatpush2.bf16.msra.mxu0 0
  %559 = vmatprep.subr.bf16.mxu0 0
  %560 = vmatpush2.bf16.msra.mxu0 0
  %561 = vmatprep.subr.bf16.mxu0 0
  %562 = vmatpush2.bf16.msra.mxu0 0
  %563 = vmatprep.subr.bf16.mxu0 0
  %564 = vmatpush2.bf16.msra.mxu0 0
  %565 = vmatprep.subr.bf16.mxu0 0
  %566 = vmatpush2.bf16.msra.mxu0 0
  %567 = vmatprep.subr.bf16.mxu0 0
  %568 = vmatpush2.bf16.msra.mxu0 0
  %569 = vmatprep.subr.bf16.mxu0 0
  %570 = vmatpush2.bf16.msra.mxu0 0
  %571 = vmatprep.mubr.bf16.mxu0 0
  %572 = vmatmul.mubr.bf16.gmra.mxu0 %v529
  %v573 = vpop.f32.mrf.mxu0
  %v574 = vadd.f32 %v443, %v573
  %v575 = vpop.f32.mrf.mxu0
  %v576 = vadd.f32 %v445, %v575
  %v577 = vpop.f32.mrf.mxu0
  %v578 = vadd.f32 %v447, %v577
  %v579 = vpop.f32.mrf.mxu0
  %v580 = vadd.f32 %v449, %v579
  %581 = vmatprep.mubr.bf16.mxu0 0
  %582 = vmatmul.mubr.bf16.gmra.mxu0 %v531
  %v583 = vpop.f32.mrf.mxu0
  %v584 = vadd.f32 %v453, %v583
  %v585 = vpop.f32.mrf.mxu0
  %v586 = vadd.f32 %v455, %v585
  %v587 = vpop.f32.mrf.mxu0
  %v588 = vadd.f32 %v457, %v587
  %v589 = vpop.f32.mrf.mxu0
  %v590 = vadd.f32 %v459, %v589
  %591 = vmatprep.mubr.bf16.mxu0 0
  %592 = vmatmul.mubr.bf16.gmra.mxu0 %v533
  %v593 = vpop.f32.mrf.mxu0
  %v594 = vadd.f32 %v463, %v593
  %v595 = vpop.f32.mrf.mxu0
  %v596 = vadd.f32 %v465, %v595
  %v597 = vpop.f32.mrf.mxu0
  %v598 = vadd.f32 %v467, %v597
  %v599 = vpop.f32.mrf.mxu0
  %v600 = vadd.f32 %v469, %v599
  %601 = vmatprep.mubr.bf16.mxu0 0
  %602 = vmatmul.mubr.bf16.gmra.mxu0 %v535
  %v603 = vpop.f32.mrf.mxu0
  %v604 = vadd.f32 %v473, %v603
  %v605 = vpop.f32.mrf.mxu0
  %v606 = vadd.f32 %v475, %v605
  %v607 = vpop.f32.mrf.mxu0
  %v608 = vadd.f32 %v477, %v607
  %v609 = vpop.f32.mrf.mxu0
  %v610 = vadd.f32 %v479, %v609
  %611 = vmatprep.mubr.bf16.mxu0 0
  %612 = vmatmul.mubr.bf16.gmra.mxu0 %v537
  %v613 = vpop.f32.mrf.mxu0
  %v614 = vadd.f32 %v483, %v613
  %v615 = vpop.f32.mrf.mxu0
  %v616 = vadd.f32 %v485, %v615
  %v617 = vpop.f32.mrf.mxu0
  %v618 = vpop.f32.mrf.mxu0
  %619 = vdwg.mxu0
  %v620 = vld [vmem:[#allocation2] sm:$0xe]
  %v621 = vld [vmem:[#allocation2 + $0x20] sm:$0x7]
  %s622 = scalar_lea.vmem %s2, 128
  %v623 = vld [vmem:[%s622] sm:$0xff]
  %v624 = vld [vmem:[%s622 + $0x8] sm:$0xff]
  %v625 = vld [vmem:[%s622 + $0x10] sm:$0xff]
  %v626 = vld [vmem:[%s622 + $0x18] sm:$0xff]
  %v627 = vld [vmem:[%s622 + $0x20] sm:$0xff]
  %v628 = vld [vmem:[%s622 + $0x28] sm:$0xff]
  %v629 = vld [vmem:[%s622 + $0x30] sm:$0xff]
  %v630 = vld [vmem:[%s622 + $0x38] sm:$0xff]
  %v633 = vunpack.c.l.b16 %v620
  %v634 = vunpack.c.l.b16 %v621
  %v635 = vpack.c.b16 %v299, %v633
  %v636 = vpack.c.b16 %v634, %v634
  %vm637 = vcmask 1046528
  %v638 = vrot.slane %v635, 1
  %v639 = vrot.slane %v308, 1
  %v640 = vsel %vm637, %v638, %v639
  %v641 = vrot.slane %v309, 1
  %v642 = vsel %vm637, %v639, %v641
  %v643 = vrot.slane %v310, 1
  %v644 = vsel %vm637, %v641, %v643
  %v645 = vrot.slane %v636, 1
  %v646 = vsel %vm637, %v643, %v645
  %v655 = vunpack.c.l.b16 %v623
  %v656 = vunpack.c.h.b16 %v623
  %v657 = vunpack.c.l.b16 %v624
  %v658 = vunpack.c.h.b16 %v624
  %v659 = vunpack.c.l.b16 %v625
  %v660 = vunpack.c.h.b16 %v625
  %v661 = vunpack.c.l.b16 %v626
  %v662 = vunpack.c.h.b16 %v626
  %v663 = vunpack.c.l.b16 %v627
  %v664 = vunpack.c.h.b16 %v627
  %v665 = vunpack.c.l.b16 %v628
  %v666 = vunpack.c.h.b16 %v628
  %v667 = vunpack.c.l.b16 %v629
  %v668 = vunpack.c.h.b16 %v629
  %v669 = vunpack.c.l.b16 %v630
  %v670 = vunpack.c.h.b16 %v630
  %v671 = vpack.c.b16 %v657, %v655
  %v672 = vpack.c.b16 %v658, %v656
  %v673 = vpack.c.b16 %v661, %v659
  %v674 = vpack.c.b16 %v662, %v660
  %v675 = vpack.c.b16 %v665, %v663
  %v676 = vpack.c.b16 %v666, %v664
  %v677 = vpack.c.b16 %v669, %v667
  %v678 = vpack.c.b16 %v670, %v668
  %v688 = vsel %vm392, %v640, 0
  %v691 = vsel %vm392, %v642, 0
  %v694 = vsel %vm392, %v644, 0
  %v697 = vsel %vm392, %v646, 0
  %v700 = vsel %vm392, %v645, 0
  %702 = vmatprep.subr.bf16.mxu0 0
  %703 = vmatpush1.bf16.msra.mxu0 0
  %704 = vmatprep.subr.bf16.mxu0 0
  %705 = vmatpush1.bf16.msra.mxu0 0
  %706 = vmatprep.subr.bf16.mxu0 0
  %707 = vmatpush1.bf16.msra.mxu0 0
  %708 = vmatprep.subr.bf16.mxu0 0
  %709 = vmatpush1.bf16.msra.mxu0 0
  %710 = vmatprep.subr.bf16.mxu0 %v678
  %711 = vmatpush1.bf16.msra.mxu0 %v677
  %712 = vmatprep.subr.bf16.mxu0 %v676
  %713 = vmatpush1.bf16.msra.mxu0 %v675
  %714 = vmatprep.subr.bf16.mxu0 %v674
  %715 = vmatpush1.bf16.msra.mxu0 %v673
  %716 = vmatprep.subr.bf16.mxu0 %v672
  %717 = vmatpush1.bf16.msra.mxu0 %v671
  %718 = vmatprep.subr.bf16.mxu0 0
  %719 = vmatpush2.bf16.msra.mxu0 0
  %720 = vmatprep.subr.bf16.mxu0 0
  %721 = vmatpush2.bf16.msra.mxu0 0
  %722 = vmatprep.subr.bf16.mxu0 0
  %723 = vmatpush2.bf16.msra.mxu0 0
  %724 = vmatprep.subr.bf16.mxu0 0
  %725 = vmatpush2.bf16.msra.mxu0 0
  %726 = vmatprep.subr.bf16.mxu0 0
  %727 = vmatpush2.bf16.msra.mxu0 0
  %728 = vmatprep.subr.bf16.mxu0 0
  %729 = vmatpush2.bf16.msra.mxu0 0
  %730 = vmatprep.subr.bf16.mxu0 0
  %731 = vmatpush2.bf16.msra.mxu0 0
  %732 = vmatprep.subr.bf16.mxu0 0
  %733 = vmatpush2.bf16.msra.mxu0 0
  %734 = vmatprep.mubr.bf16.mxu0 0
  %735 = vmatmul.mubr.bf16.gmra.mxu0 %v688
  %v736 = vpop.f32.mrf.mxu0
  %v737 = vadd.f32 0.0, %v736
  %v738 = vpop.f32.mrf.mxu0
  %v739 = vadd.f32 0.0, %v738
  %v740 = vpop.f32.mrf.mxu0
  %v741 = vadd.f32 0.0, %v740
  %v742 = vpop.f32.mrf.mxu0
  %v743 = vadd.f32 0.0, %v742
  %744 = vmatprep.mubr.bf16.mxu0 0
  %745 = vmatmul.mubr.bf16.gmra.mxu0 %v691
  %v746 = vpop.f32.mrf.mxu0
  %v747 = vadd.f32 0.0, %v746
  %v748 = vpop.f32.mrf.mxu0
  %v749 = vadd.f32 0.0, %v748
  %v750 = vpop.f32.mrf.mxu0
  %v751 = vadd.f32 0.0, %v750
  %v752 = vpop.f32.mrf.mxu0
  %v753 = vadd.f32 0.0, %v752
  %754 = vmatprep.mubr.bf16.mxu0 0
  %755 = vmatmul.mubr.bf16.gmra.mxu0 %v694
  %v756 = vpop.f32.mrf.mxu0
  %v757 = vadd.f32 0.0, %v756
  %v758 = vpop.f32.mrf.mxu0
  %v759 = vadd.f32 0.0, %v758
  %v760 = vpop.f32.mrf.mxu0
  %v761 = vadd.f32 0.0, %v760
  %v762 = vpop.f32.mrf.mxu0
  %v763 = vadd.f32 0.0, %v762
  %764 = vmatprep.mubr.bf16.mxu0 0
  %765 = vmatmul.mubr.bf16.gmra.mxu0 %v697
  %v766 = vpop.f32.mrf.mxu0
  %v767 = vadd.f32 0.0, %v766
  %v768 = vpop.f32.mrf.mxu0
  %v769 = vadd.f32 0.0, %v768
  %v770 = vpop.f32.mrf.mxu0
  %v771 = vadd.f32 0.0, %v770
  %v772 = vpop.f32.mrf.mxu0
  %v773 = vadd.f32 0.0, %v772
  %774 = vmatprep.mubr.bf16.mxu0 0
  %775 = vmatmul.mubr.bf16.gmra.mxu0 %v700
  %v776 = vpop.f32.mrf.mxu0
  %v777 = vadd.f32 0.0, %v776
  %v778 = vpop.f32.mrf.mxu0
  %v779 = vadd.f32 0.0, %v778
  %v780 = vpop.f32.mrf.mxu0
  %v781 = vpop.f32.mrf.mxu0
  %782 = vdwg.mxu0
  %v783 = vadd.f32 %v574, %v737
  %v784 = vadd.f32 %v576, %v739
  %v785 = vadd.f32 %v578, %v741
  %v786 = vadd.f32 %v580, %v743
  %v787 = vadd.f32 %v584, %v747
  %v788 = vadd.f32 %v586, %v749
  %v789 = vadd.f32 %v588, %v751
  %v790 = vadd.f32 %v590, %v753
  %v791 = vadd.f32 %v594, %v757
  %v792 = vadd.f32 %v596, %v759
  %v793 = vadd.f32 %v598, %v761
  %v794 = vadd.f32 %v600, %v763
  %v795 = vadd.f32 %v604, %v767
  %v796 = vadd.f32 %v606, %v769
  %v797 = vadd.f32 %v608, %v771
  %v798 = vadd.f32 %v610, %v773
  %v799 = vadd.f32 %v614, %v777
  %v800 = vadd.f32 %v616, %v779
  %802 = vset.pattern.permute.xlu0 0
  %803 = vperm.xlu0 %802, %v252
  %v804 = vpop.permute.xlu0 %803
  %807 = vset.pattern.permute.xlu0 0
  %808 = vperm.xlu0 %807, %v253
  %v809 = vpop.permute.xlu0 %808
  %812 = vset.pattern.permute.xlu0 0
  %813 = vperm.xlu0 %812, %v254
  %v814 = vpop.permute.xlu0 %813
  %817 = vset.pattern.permute.xlu0 0
  %818 = vperm.xlu0 %817, %v255
  %v819 = vpop.permute.xlu0 %818
  %822 = vset.pattern.permute.xlu0 0
  %823 = vperm.xlu0 %822, %v256
  %v824 = vpop.permute.xlu0 %823
  %827 = vset.pattern.permute.xlu0 0
  %828 = vperm.xlu0 %827, %v257
  %v829 = vpop.permute.xlu0 %828
  %832 = vset.pattern.permute.xlu0 0
  %833 = vperm.xlu0 %832, %v258
  %v834 = vpop.permute.xlu0 %833
  %837 = vset.pattern.permute.xlu0 0
  %838 = vperm.xlu0 %837, %v259
  %v839 = vpop.permute.xlu0 %838
  %842 = vset.pattern.permute.xlu0 0
  %843 = vperm.xlu0 %842, %v260
  %v844 = vpop.permute.xlu0 %843
  %v846 = vmul.f32 %v783, %v804
  %v847 = vmul.f32 %v784, %v804
  %v848 = vmul.f32 %v785, %v809
  %v849 = vmul.f32 %v786, %v809
  %v850 = vmul.f32 %v787, %v814
  %v851 = vmul.f32 %v788, %v814
  %v852 = vmul.f32 %v789, %v819
  %v853 = vmul.f32 %v790, %v819
  %v854 = vmul.f32 %v791, %v824
  %v855 = vmul.f32 %v792, %v824
  %v856 = vmul.f32 %v793, %v829
  %v857 = vmul.f32 %v794, %v829
  %v858 = vmul.f32 %v795, %v834
  %v859 = vmul.f32 %v796, %v834
  %v860 = vmul.f32 %v797, %v839
  %v861 = vmul.f32 %v798, %v839
  %v862 = vmul.f32 %v799, %v844
  %v863 = vmul.f32 %v800, %v844
  %v864 = vadd.f32 %v846, %v848
  %v865 = vadd.f32 %v864, %v850
  %v866 = vadd.f32 %v865, %v852
  %v867 = vadd.f32 %v866, %v854
  %v868 = vadd.f32 %v867, %v856
  %v869 = vadd.f32 %v868, %v858
  %v870 = vadd.f32 %v869, %v860
  %vm871 = vcmask 1042432
  %v872 = vsel %vm871, %v862, 0.0
  %v873 = vadd.f32 %v870, %v872
  %v874 = vrot.slane %v873, 4
  %v875 = vadd.f32 %v873, %v874
  %v876 = vrot.slane %v875, 2
  %v877 = vadd.f32 %v875, %v876
  %v878 = vrot.slane %v877, 1
  %v879 = vadd.f32 %v877, %v878
  %v880 = vadd.f32 %v847, %v849
  %v881 = vadd.f32 %v880, %v851
  %v882 = vadd.f32 %v881, %v853
  %v883 = vadd.f32 %v882, %v855
  %v884 = vadd.f32 %v883, %v857
  %v885 = vadd.f32 %v884, %v859
  %v886 = vadd.f32 %v885, %v861
  %v887 = vsel %vm871, %v863, 0.0
  %v888 = vadd.f32 %v886, %v887
  %v889 = vrot.slane %v888, 4
  %v890 = vadd.f32 %v888, %v889
  %v891 = vrot.slane %v890, 2
  %v892 = vadd.f32 %v890, %v891
  %v893 = vrot.slane %v892, 1
  %v894 = vadd.f32 %v892, %v893
  %v895 = vmul.f32 %v846, %v783
  %v896 = vmul.f32 %v847, %v784
  %v897 = vmul.f32 %v848, %v785
  %v898 = vmul.f32 %v849, %v786
  %v899 = vmul.f32 %v850, %v787
  %v900 = vmul.f32 %v851, %v788
  %v901 = vmul.f32 %v852, %v789
  %v902 = vmul.f32 %v853, %v790
  %v903 = vmul.f32 %v854, %v791
  %v904 = vmul.f32 %v855, %v792
  %v905 = vmul.f32 %v856, %v793
  %v906 = vmul.f32 %v857, %v794
  %v907 = vmul.f32 %v858, %v795
  %v908 = vmul.f32 %v859, %v796
  %v909 = vmul.f32 %v860, %v797
  %v910 = vmul.f32 %v861, %v798
  %v911 = vmul.f32 %v862, %v799
  %v912 = vmul.f32 %v863, %v800
  %v913 = vadd.f32 %v895, %v897
  %v914 = vadd.f32 %v913, %v899
  %v915 = vadd.f32 %v914, %v901
  %v916 = vadd.f32 %v915, %v903
  %v917 = vadd.f32 %v916, %v905
  %v918 = vadd.f32 %v917, %v907
  %v919 = vadd.f32 %v918, %v909
  %v920 = vsel %vm871, %v911, 0.0
  %v921 = vadd.f32 %v919, %v920
  %v922 = vrot.slane %v921, 4
  %v923 = vadd.f32 %v921, %v922
  %v924 = vrot.slane %v923, 2
  %v925 = vadd.f32 %v923, %v924
  %v926 = vrot.slane %v925, 1
  %v927 = vadd.f32 %v925, %v926
  %v928 = vadd.f32 %v896, %v898
  %v929 = vadd.f32 %v928, %v900
  %v930 = vadd.f32 %v929, %v902
  %v931 = vadd.f32 %v930, %v904
  %v932 = vadd.f32 %v931, %v906
  %v933 = vadd.f32 %v932, %v908
  %v934 = vadd.f32 %v933, %v910
  %v935 = vsel %vm871, %v912, 0.0
  %v936 = vadd.f32 %v934, %v935
  %v937 = vrot.slane %v936, 4
  %v938 = vadd.f32 %v936, %v937
  %v939 = vrot.slane %v938, 2
  %v940 = vadd.f32 %v938, %v939
  %v941 = vrot.slane %v940, 1
  %v942 = vadd.f32 %v940, %v941
  %943 = vmatprep.subr.mxu0 0.0
  %944 = vmatpush1.msra.mxu0 %v233
  %945 = vmatprep.subr.mxu0 0.0
  %946 = vmatpush1.msra.mxu0 %v232
  %947 = vmatprep.subr.mxu0 0.0
  %948 = vmatpush1.msra.mxu0 %v231
  %949 = vmatprep.subr.mxu0 0.0
  %950 = vmatpush1.msra.mxu0 %v230
  %951 = vmatprep.subr.mxu0 0.0
  %952 = vmatpush1.msra.mxu0 %v229
  %953 = vmatprep.subr.mxu0 0.0
  %954 = vmatpush1.msra.mxu0 %v228
  %955 = vmatprep.subr.mxu0 0.0
  %956 = vmatpush1.msra.mxu0 %v227
  %957 = vmatprep.subr.mxu0 0.0
  %958 = vmatpush1.msra.mxu0 %v226
  %959 = vmatprep.subr.mxu0 0.0
  %960 = vmatpush1.msra.mxu0 %v225
  %961 = vmatprep.subr.mxu0 0.0
  %962 = vmatpush1.msra.mxu0 %v224
  %963 = vmatprep.subr.mxu0 0.0
  %964 = vmatpush1.msra.mxu0 %v223
  %965 = vmatprep.subr.mxu0 0.0
  %966 = vmatpush1.msra.mxu0 %v222
  %967 = vmatprep.subr.mxu0 0.0
  %968 = vmatpush1.msra.mxu0 %v221
  %969 = vmatprep.subr.mxu0 0.0
  %970 = vmatpush1.msra.mxu0 %v220
  %971 = vmatprep.subr.mxu0 0.0
  %972 = vmatpush1.msra.mxu0 %v219
  %973 = vmatprep.subr.mxu0 0.0
  %974 = vmatpush1.msra.mxu0 %v218
  %975 = vmatprep.subr.mxu0 0.0
  %976 = vmatpush2.msra.mxu0 %v249
  %977 = vmatprep.subr.mxu0 0.0
  %978 = vmatpush2.msra.mxu0 %v248
  %979 = vmatprep.subr.mxu0 0.0
  %980 = vmatpush2.msra.mxu0 %v247
  %981 = vmatprep.subr.mxu0 0.0
  %982 = vmatpush2.msra.mxu0 %v246
  %983 = vmatprep.subr.mxu0 0.0
  %984 = vmatpush2.msra.mxu0 %v245
  %985 = vmatprep.subr.mxu0 0.0
  %986 = vmatpush2.msra.mxu0 %v244
  %987 = vmatprep.subr.mxu0 0.0
  %988 = vmatpush2.msra.mxu0 %v243
  %989 = vmatprep.subr.mxu0 0.0
  %990 = vmatpush2.msra.mxu0 %v242
  %991 = vmatprep.subr.mxu0 0.0
  %992 = vmatpush2.msra.mxu0 %v241
  %993 = vmatprep.subr.mxu0 0.0
  %994 = vmatpush2.msra.mxu0 %v240
  %995 = vmatprep.subr.mxu0 0.0
  %996 = vmatpush2.msra.mxu0 %v239
  %997 = vmatprep.subr.mxu0 0.0
  %998 = vmatpush2.msra.mxu0 %v238
  %999 = vmatprep.subr.mxu0 0.0
  %1000 = vmatpush2.msra.mxu0 %v237
  %1001 = vmatprep.subr.mxu0 0.0
  %1002 = vmatpush2.msra.mxu0 %v236
  %1003 = vmatprep.subr.mxu0 0.0
  %1004 = vmatpush2.msra.mxu0 %v235
  %1005 = vmatprep.subr.mxu0 0.0
  %1006 = vmatpush2.msra.mxu0 %v234
  %1007 = vmatprep.mubr.f32.mxu0 %v894
  %1008 = vmatmul.mubr.f32.gmra.mxu0 %v879
  %v1009 = vpop.f32.mrf.mxu0
  %v1010 = vadd.f32 0.0, %v1009
  %v1011 = vpop.f32.mrf.mxu0
  %1012 = vdwg.mxu0
  %v1013 = vmul.f32 %v1010, 0.00048828125
  %1014 = vmatprep.subr.mxu0 0.0
  %1015 = vmatpush1.msra.mxu0 %v233
  %1016 = vmatprep.subr.mxu0 0.0
  %1017 = vmatpush1.msra.mxu0 %v232
  %1018 = vmatprep.subr.mxu0 0.0
  %1019 = vmatpush1.msra.mxu0 %v231
  %1020 = vmatprep.subr.mxu0 0.0
  %1021 = vmatpush1.msra.mxu0 %v230
  %1022 = vmatprep.subr.mxu0 0.0
  %1023 = vmatpush1.msra.mxu0 %v229
  %1024 = vmatprep.subr.mxu0 0.0
  %1025 = vmatpush1.msra.mxu0 %v228
  %1026 = vmatprep.subr.mxu0 0.0
  %1027 = vmatpush1.msra.mxu0 %v227
  %1028 = vmatprep.subr.mxu0 0.0
  %1029 = vmatpush1.msra.mxu0 %v226
  %1030 = vmatprep.subr.mxu0 0.0
  %1031 = vmatpush1.msra.mxu0 %v225
  %1032 = vmatprep.subr.mxu0 0.0
  %1033 = vmatpush1.msra.mxu0 %v224
  %1034 = vmatprep.subr.mxu0 0.0
  %1035 = vmatpush1.msra.mxu0 %v223
  %1036 = vmatprep.subr.mxu0 0.0
  %1037 = vmatpush1.msra.mxu0 %v222
  %1038 = vmatprep.subr.mxu0 0.0
  %1039 = vmatpush1.msra.mxu0 %v221
  %1040 = vmatprep.subr.mxu0 0.0
  %1041 = vmatpush1.msra.mxu0 %v220
  %1042 = vmatprep.subr.mxu0 0.0
  %1043 = vmatpush1.msra.mxu0 %v219
  %1044 = vmatprep.subr.mxu0 0.0
  %1045 = vmatpush1.msra.mxu0 %v218
  %1046 = vmatprep.subr.mxu0 0.0
  %1047 = vmatpush2.msra.mxu0 %v249
  %1048 = vmatprep.subr.mxu0 0.0
  %1049 = vmatpush2.msra.mxu0 %v248
  %1050 = vmatprep.subr.mxu0 0.0
  %1051 = vmatpush2.msra.mxu0 %v247
  %1052 = vmatprep.subr.mxu0 0.0
  %1053 = vmatpush2.msra.mxu0 %v246
  %1054 = vmatprep.subr.mxu0 0.0
  %1055 = vmatpush2.msra.mxu0 %v245
  %1056 = vmatprep.subr.mxu0 0.0
  %1057 = vmatpush2.msra.mxu0 %v244
  %1058 = vmatprep.subr.mxu0 0.0
  %1059 = vmatpush2.msra.mxu0 %v243
  %1060 = vmatprep.subr.mxu0 0.0
  %1061 = vmatpush2.msra.mxu0 %v242
  %1062 = vmatprep.subr.mxu0 0.0
  %1063 = vmatpush2.msra.mxu0 %v241
  %1064 = vmatprep.subr.mxu0 0.0
  %1065 = vmatpush2.msra.mxu0 %v240
  %1066 = vmatprep.subr.mxu0 0.0
  %1067 = vmatpush2.msra.mxu0 %v239
  %1068 = vmatprep.subr.mxu0 0.0
  %1069 = vmatpush2.msra.mxu0 %v238
  %1070 = vmatprep.subr.mxu0 0.0
  %1071 = vmatpush2.msra.mxu0 %v237
  %1072 = vmatprep.subr.mxu0 0.0
  %1073 = vmatpush2.msra.mxu0 %v236
  %1074 = vmatprep.subr.mxu0 0.0
  %1075 = vmatpush2.msra.mxu0 %v235
  %1076 = vmatprep.subr.mxu0 0.0
  %1077 = vmatpush2.msra.mxu0 %v234
  %1078 = vmatprep.mubr.f32.mxu0 %v942
  %1079 = vmatmul.mubr.f32.gmra.mxu0 %v927
  %v1080 = vpop.f32.mrf.mxu0
  %v1081 = vadd.f32 0.0, %v1080
  %v1082 = vpop.f32.mrf.mxu0
  %1083 = vdwg.mxu0
  %v1084 = vmul.f32 %v1081, 0.00048828125
  %v1085 = vmul.f32 %v1013, %v1013
  %v1086 = vsub.f32 %v1084, %v1085
  %v1087 = vmax.f32 %v1086, 0.0
  %v1088 = vadd.f32 %v1087, 1e-05
  %v1089 = vrsqrt.pop %v1088
  %v1090 = vmul.f32 %v261, %v1089
  %v1091 = vmul.f32 %v1013, %v1090
  %v1092 = vsub.f32 %v262, %v1091
  %vm1093 = vcmask 64512
  %v1095 = vsel %vm1093, %v1090, 0
  %1097 = vmatprep.subr.mxu0 0.0
  %1098 = vmatpush1.msra.mxu0 0.0
  %1099 = vmatprep.subr.mxu0 0.0
  %1100 = vmatpush1.msra.mxu0 0.0
  %1101 = vmatprep.subr.mxu0 0.0
  %1102 = vmatpush1.msra.mxu0 0.0
  %1103 = vmatprep.subr.mxu0 0.0
  %1104 = vmatpush1.msra.mxu0 0.0
  %1105 = vmatprep.subr.mxu0 0.0
  %1106 = vmatpush1.msra.mxu0 0.0
  %1107 = vmatprep.subr.mxu0 0.0
  %1108 = vmatpush1.msra.mxu0 0.0
  %1109 = vmatprep.subr.mxu0 0.0
  %1110 = vmatpush1.msra.mxu0 0.0
  %1111 = vmatprep.subr.mxu0 0.0
  %1112 = vmatpush1.msra.mxu0 0.0
  %1113 = vmatprep.subr.mxu0 0.0
  %1114 = vmatpush1.msra.mxu0 0.0
  %1115 = vmatprep.subr.mxu0 0.0
  %1116 = vmatpush1.msra.mxu0 0.0
  %1117 = vmatprep.subr.mxu0 0.0
  %1118 = vmatpush1.msra.mxu0 0.0
  %1119 = vmatprep.subr.mxu0 0.0
  %1120 = vmatpush1.msra.mxu0 0.0
  %1121 = vmatprep.subr.mxu0 0.0
  %1122 = vmatpush1.msra.mxu0 0.0
  %1123 = vmatprep.subr.mxu0 0.0
  %1124 = vmatpush1.msra.mxu0 0.0
  %1125 = vmatprep.subr.mxu0 0.0
  %1126 = vmatpush1.msra.mxu0 0.0
  %1127 = vmatprep.subr.mxu0 %v251
  %1128 = vmatpush1.msra.mxu0 %v250
  %1129 = vmatprep.subr.mxu0 0.0
  %1130 = vmatpush2.msra.mxu0 0.0
  %1131 = vmatprep.subr.mxu0 0.0
  %1132 = vmatpush2.msra.mxu0 0.0
  %1133 = vmatprep.subr.mxu0 0.0
  %1134 = vmatpush2.msra.mxu0 0.0
  %1135 = vmatprep.subr.mxu0 0.0
  %1136 = vmatpush2.msra.mxu0 0.0
  %1137 = vmatprep.subr.mxu0 0.0
  %1138 = vmatpush2.msra.mxu0 0.0
  %1139 = vmatprep.subr.mxu0 0.0
  %1140 = vmatpush2.msra.mxu0 0.0
  %1141 = vmatprep.subr.mxu0 0.0
  %1142 = vmatpush2.msra.mxu0 0.0
  %1143 = vmatprep.subr.mxu0 0.0
  %1144 = vmatpush2.msra.mxu0 0.0
  %1145 = vmatprep.subr.mxu0 0.0
  %1146 = vmatpush2.msra.mxu0 0.0
  %1147 = vmatprep.subr.mxu0 0.0
  %1148 = vmatpush2.msra.mxu0 0.0
  %1149 = vmatprep.subr.mxu0 0.0
  %1150 = vmatpush2.msra.mxu0 0.0
  %1151 = vmatprep.subr.mxu0 0.0
  %1152 = vmatpush2.msra.mxu0 0.0
  %1153 = vmatprep.subr.mxu0 0.0
  %1154 = vmatpush2.msra.mxu0 0.0
  %1155 = vmatprep.subr.mxu0 0.0
  %1156 = vmatpush2.msra.mxu0 0.0
  %1157 = vmatprep.subr.mxu0 0.0
  %1158 = vmatpush2.msra.mxu0 0.0
  %1159 = vmatprep.subr.mxu0 0.0
  %1160 = vmatpush2.msra.mxu0 0.0
  %1161 = vmatprep.mubr.f32.mxu0 0.0
  %1162 = vmatmul.mubr.f32.gmra.mxu0 %v1095
  %v1163 = vpop.f32.mrf.mxu0
  %v1164 = vadd.f32 0.0, %v1163
  %v1165 = vpop.f32.mrf.mxu0
  %v1166 = vadd.f32 0.0, %v1165
  %1167 = vdwg.mxu0
  %v1169 = vsel %vm1093, %v1092, 0
  %1171 = vmatprep.subr.mxu0 0.0
  %1172 = vmatpush1.msra.mxu0 0.0
  %1173 = vmatprep.subr.mxu0 0.0
  %1174 = vmatpush1.msra.mxu0 0.0
  %1175 = vmatprep.subr.mxu0 0.0
  %1176 = vmatpush1.msra.mxu0 0.0
  %1177 = vmatprep.subr.mxu0 0.0
  %1178 = vmatpush1.msra.mxu0 0.0
  %1179 = vmatprep.subr.mxu0 0.0
  %1180 = vmatpush1.msra.mxu0 0.0
  %1181 = vmatprep.subr.mxu0 0.0
  %1182 = vmatpush1.msra.mxu0 0.0
  %1183 = vmatprep.subr.mxu0 0.0
  %1184 = vmatpush1.msra.mxu0 0.0
  %1185 = vmatprep.subr.mxu0 0.0
  %1186 = vmatpush1.msra.mxu0 0.0
  %1187 = vmatprep.subr.mxu0 0.0
  %1188 = vmatpush1.msra.mxu0 0.0
  %1189 = vmatprep.subr.mxu0 0.0
  %1190 = vmatpush1.msra.mxu0 0.0
  %1191 = vmatprep.subr.mxu0 0.0
  %1192 = vmatpush1.msra.mxu0 0.0
  %1193 = vmatprep.subr.mxu0 0.0
  %1194 = vmatpush1.msra.mxu0 0.0
  %1195 = vmatprep.subr.mxu0 0.0
  %1196 = vmatpush1.msra.mxu0 0.0
  %1197 = vmatprep.subr.mxu0 0.0
  %1198 = vmatpush1.msra.mxu0 0.0
  %1199 = vmatprep.subr.mxu0 0.0
  %1200 = vmatpush1.msra.mxu0 0.0
  %1201 = vmatprep.subr.mxu0 %v251
  %1202 = vmatpush1.msra.mxu0 %v250
  %1203 = vmatprep.subr.mxu0 0.0
  %1204 = vmatpush2.msra.mxu0 0.0
  %1205 = vmatprep.subr.mxu0 0.0
  %1206 = vmatpush2.msra.mxu0 0.0
  %1207 = vmatprep.subr.mxu0 0.0
  %1208 = vmatpush2.msra.mxu0 0.0
  %1209 = vmatprep.subr.mxu0 0.0
  %1210 = vmatpush2.msra.mxu0 0.0
  %1211 = vmatprep.subr.mxu0 0.0
  %1212 = vmatpush2.msra.mxu0 0.0
  %1213 = vmatprep.subr.mxu0 0.0
  %1214 = vmatpush2.msra.mxu0 0.0
  %1215 = vmatprep.subr.mxu0 0.0
  %1216 = vmatpush2.msra.mxu0 0.0
  %1217 = vmatprep.subr.mxu0 0.0
  %1218 = vmatpush2.msra.mxu0 0.0
  %1219 = vmatprep.subr.mxu0 0.0
  %1220 = vmatpush2.msra.mxu0 0.0
  %1221 = vmatprep.subr.mxu0 0.0
  %1222 = vmatpush2.msra.mxu0 0.0
  %1223 = vmatprep.subr.mxu0 0.0
  %1224 = vmatpush2.msra.mxu0 0.0
  %1225 = vmatprep.subr.mxu0 0.0
  %1226 = vmatpush2.msra.mxu0 0.0
  %1227 = vmatprep.subr.mxu0 0.0
  %1228 = vmatpush2.msra.mxu0 0.0
  %1229 = vmatprep.subr.mxu0 0.0
  %1230 = vmatpush2.msra.mxu0 0.0
  %1231 = vmatprep.subr.mxu0 0.0
  %1232 = vmatpush2.msra.mxu0 0.0
  %1233 = vmatprep.subr.mxu0 0.0
  %1234 = vmatpush2.msra.mxu0 0.0
  %1235 = vmatprep.mubr.f32.mxu0 0.0
  %1236 = vmatmul.mubr.f32.gmra.mxu0 %v1169
  %v1237 = vpop.f32.mrf.mxu0
  %v1238 = vadd.f32 0.0, %v1237
  %v1239 = vpop.f32.mrf.mxu0
  %v1240 = vadd.f32 0.0, %v1239
  %1241 = vdwg.mxu0
  %v1242 = vlaneseq
  %v1243 = vshrl.u32 %v1242, 7
  %v1244 = vsub.s32 0, %v1243
  %v1245 = vrot.slane %v1164, %v1244
  %v1246 = vlaneseq
  %v1247 = vshrl.u32 %v1246, 7
  %v1248 = vsub.s32 0, %v1247
  %v1249 = vrot.slane %v1166, %v1248
  %v1250 = vmul.f32 %v783, %v1245
  %v1251 = vmul.f32 %v784, %v1249
  %v1252 = vmul.f32 %v785, %v1245
  %v1253 = vmul.f32 %v786, %v1249
  %v1254 = vmul.f32 %v787, %v1245
  %v1255 = vmul.f32 %v788, %v1249
  %v1256 = vmul.f32 %v789, %v1245
  %v1257 = vmul.f32 %v790, %v1249
  %v1258 = vmul.f32 %v791, %v1245
  %v1259 = vmul.f32 %v792, %v1249
  %v1260 = vmul.f32 %v793, %v1245
  %v1261 = vmul.f32 %v794, %v1249
  %v1262 = vmul.f32 %v795, %v1245
  %v1263 = vmul.f32 %v796, %v1249
  %v1264 = vmul.f32 %v797, %v1245
  %v1265 = vmul.f32 %v798, %v1249
  %v1266 = vmul.f32 %v799, %v1245
  %v1267 = vmul.f32 %v800, %v1249
  %v1268 = vlaneseq
  %v1269 = vshrl.u32 %v1268, 7
  %v1270 = vsub.s32 0, %v1269
  %v1271 = vrot.slane %v1238, %v1270
  %v1272 = vlaneseq
  %v1273 = vshrl.u32 %v1272, 7
  %v1274 = vsub.s32 0, %v1273
  %v1275 = vrot.slane %v1240, %v1274
  %v1276 = vadd.f32 %v1250, %v1271
  %v1277 = vadd.f32 %v1251, %v1275
  %v1278 = vadd.f32 %v1252, %v1271
  %v1279 = vadd.f32 %v1253, %v1275
  %v1280 = vadd.f32 %v1254, %v1271
  %v1281 = vadd.f32 %v1255, %v1275
  %v1282 = vadd.f32 %v1256, %v1271
  %v1283 = vadd.f32 %v1257, %v1275
  %v1284 = vadd.f32 %v1258, %v1271
  %v1285 = vadd.f32 %v1259, %v1275
  %v1286 = vadd.f32 %v1260, %v1271
  %v1287 = vadd.f32 %v1261, %v1275
  %v1288 = vadd.f32 %v1262, %v1271
  %v1289 = vadd.f32 %v1263, %v1275
  %v1290 = vadd.f32 %v1264, %v1271
  %v1291 = vadd.f32 %v1265, %v1275
  %v1292 = vadd.f32 %v1266, %v1271
  %v1293 = vadd.f32 %v1267, %v1275
  %v1294 = vmax.f32 %v1276, 0.0
  %v1295 = vmax.f32 %v1277, 0.0
  %v1296 = vmax.f32 %v1278, 0.0
  %v1297 = vmax.f32 %v1279, 0.0
  %v1298 = vmax.f32 %v1280, 0.0
  %v1299 = vmax.f32 %v1281, 0.0
  %v1300 = vmax.f32 %v1282, 0.0
  %v1301 = vmax.f32 %v1283, 0.0
  %v1302 = vmax.f32 %v1284, 0.0
  %v1303 = vmax.f32 %v1285, 0.0
  %v1304 = vmax.f32 %v1286, 0.0
  %v1305 = vmax.f32 %v1287, 0.0
  %v1306 = vmax.f32 %v1288, 0.0
  %v1307 = vmax.f32 %v1289, 0.0
  %v1308 = vmax.f32 %v1290, 0.0
  %v1309 = vmax.f32 %v1291, 0.0
  %v1310 = vmax.f32 %v1292, 0.0
  %v1311 = vmax.f32 %v1293, 0.0
  %v1312 = vpack.c.bf16 %v1296, %v1294
  %v1313 = vpack.c.bf16 %v1297, %v1295
  %v1314 = vpack.c.bf16 %v1300, %v1298
  %v1315 = vpack.c.bf16 %v1301, %v1299
  %v1316 = vpack.c.bf16 %v1304, %v1302
  %v1317 = vpack.c.bf16 %v1305, %v1303
  %v1318 = vpack.c.bf16 %v1308, %v1306
  %v1319 = vpack.c.bf16 %v1309, %v1307
  %v1320 = vpack.c.bf16 %v1310, %v1310
  %v1321 = vpack.c.bf16 %v1311, %v1311
  %v1332 = vunpack.c.l.b16 %v1312
  %v1333 = vunpack.c.l.b16 %v1313
  %v1334 = vunpack.c.h.b16 %v1312
  %v1335 = vunpack.c.h.b16 %v1313
  %v1336 = vunpack.c.l.b16 %v1314
  %v1337 = vunpack.c.l.b16 %v1315
  %v1338 = vunpack.c.h.b16 %v1314
  %v1339 = vunpack.c.h.b16 %v1315
  %v1340 = vunpack.c.l.b16 %v1316
  %v1341 = vunpack.c.l.b16 %v1317
  %v1342 = vunpack.c.h.b16 %v1316
  %v1343 = vunpack.c.h.b16 %v1317
  %v1344 = vunpack.c.l.b16 %v1318
  %v1345 = vunpack.c.l.b16 %v1319
  %v1346 = vunpack.c.h.b16 %v1318
  %v1347 = vunpack.c.h.b16 %v1319
  %v1348 = vunpack.c.l.b16 %v1320
  %v1349 = vunpack.c.l.b16 %v1321
  %v1350 = vpack.c.b16 %v1333, %v1332
  %v1351 = vpack.c.b16 %v1335, %v1334
  %v1352 = vpack.c.b16 %v1337, %v1336
  %v1353 = vpack.c.b16 %v1339, %v1338
  %v1354 = vpack.c.b16 %v1341, %v1340
  %v1355 = vpack.c.b16 %v1343, %v1342
  %v1356 = vpack.c.b16 %v1345, %v1344
  %v1357 = vpack.c.b16 %v1347, %v1346
  %v1358 = vpack.c.b16 %v1349, %v1348
  %vm1359 = vsmask.f32 256
  %vm1360 = vsmask.f32 4368
  %vm1361 = vmor %vm1359, %vm1360
  %v1363 = vshrl.u32 %v1350, 16
  %v1365 = vrot.slane %v1363, 7
  %v1366 = vshll.u32 %v1350, 16
  %v1368 = vor.u32 %v1365, %v1366
  %v1369 = vrot.slane %v1365, 4
  %v1371 = vshrl.u32 %v1351, 16
  %v1373 = vrot.slane %v1371, 7
  %v1374 = vshll.u32 %v1351, 16
  %v1376 = vor.u32 %v1373, %v1374
  %v1377 = vsel %vm1361, %v1369, %v1376
  %v1378 = vrot.slane %v1373, 4
  %v1380 = vshrl.u32 %v1352, 16
  %v1382 = vrot.slane %v1380, 7
  %v1383 = vshll.u32 %v1352, 16
  %v1385 = vor.u32 %v1382, %v1383
  %v1386 = vsel %vm1361, %v1378, %v1385
  %v1387 = vrot.slane %v1382, 4
  %v1389 = vshrl.u32 %v1353, 16
  %v1391 = vrot.slane %v1389, 7
  %v1392 = vshll.u32 %v1353, 16
  %v1394 = vor.u32 %v1391, %v1392
  %v1395 = vsel %vm1361, %v1387, %v1394
  %v1396 = vrot.slane %v1391, 4
  %v1398 = vshrl.u32 %v1354, 16
  %v1400 = vrot.slane %v1398, 7
  %v1401 = vshll.u32 %v1354, 16
  %v1403 = vor.u32 %v1400, %v1401
  %v1404 = vsel %vm1361, %v1396, %v1403
  %v1405 = vrot.slane %v1400, 4
  %v1407 = vshrl.u32 %v1355, 16
  %v1409 = vrot.slane %v1407, 7
  %v1410 = vshll.u32 %v1355, 16
  %v1412 = vor.u32 %v1409, %v1410
  %v1413 = vsel %vm1361, %v1405, %v1412
  %v1414 = vrot.slane %v1409, 4
  %v1416 = vshrl.u32 %v1356, 16
  %v1418 = vrot.slane %v1416, 7
  %v1419 = vshll.u32 %v1356, 16
  %v1421 = vor.u32 %v1418, %v1419
  %v1422 = vsel %vm1361, %v1414, %v1421
  %v1423 = vrot.slane %v1418, 4
  %v1425 = vshrl.u32 %v1357, 16
  %v1427 = vrot.slane %v1425, 7
  %v1428 = vshll.u32 %v1357, 16
  %v1430 = vor.u32 %v1427, %v1428
  %v1431 = vsel %vm1361, %v1423, %v1430
  %v1432 = vrot.slane %v1427, 4
  %v1434 = vshrl.u32 %v1358, 16
  %v1436 = vrot.slane %v1434, 7
  %v1437 = vshll.u32 %v1358, 16
  %v1439 = vor.u32 %v1436, %v1437
  %v1440 = vsel %vm1361, %v1432, %v1439
  %vm1450 = vcmask 1043456
  %vm1451 = vsmask.f32 7938
  %vm1452 = vmand %vm1450, %vm1451
  %vm1453 = vcmask 1047556
  %vm1454 = vsmask.f32 7954
  %vm1455 = vmand %vm1453, %vm1454
  %vm1456 = vmor %vm1455, %vm1452
  %v1457 = vld [vmem:[#allocation3] sm:$0xff]
  %v1458 = vsel %vm1456, %v1368, %v1457
  %1459 = vst [vmem:[#allocation3] sm:$0xff] %v1458
  %1460 = vst [vmem:[#allocation3 + $0x8] sm:$0xff] %v1377
  %1461 = vst [vmem:[#allocation3 + $0x10] sm:$0xff] %v1386
  %1462 = vst [vmem:[#allocation3 + $0x18] sm:$0xff] %v1395
  %1463 = vst [vmem:[#allocation3 + $0x20] sm:$0xff] %v1404
  %1464 = vst [vmem:[#allocation3 + $0x28] sm:$0xff] %v1413
  %1465 = vst [vmem:[#allocation3 + $0x30] sm:$0xff] %v1422
  %1466 = vst [vmem:[#allocation3 + $0x38] sm:$0xff] %v1431
  %1467 = vst [vmem:[#allocation3 + $0x40] sm:$0x33] %v1440
  %vm1468 = vcmask 1040384
  %vm1469 = vmand %vm1468, %vm1359
  %vm1470 = vcmask 1044484
  %vm1471 = vsmask.f32 4352
  %vm1472 = vmand %vm1470, %vm1471
  %vm1473 = vmor %vm1472, %vm1469
  %v1474 = vld [vmem:[#allocation3] sm:$0x11]
  %v1475 = vsel %vm1473, 0, %v1474
  %1476 = vst [vmem:[#allocation3] sm:$0x11] %v1475
  %vm1477 = vcmask 1041408
  %vm1478 = vsmask.f32 1282
  %vm1479 = vmand %vm1477, %vm1478
  %vm1480 = vcmask 1045508
  %vm1481 = vsmask.f32 5394
  %vm1482 = vmand %vm1480, %vm1481
  %vm1483 = vmor %vm1482, %vm1479
  %v1484 = vld [vmem:[#allocation3 + $0x20] sm:$0x33]
  %v1485 = vsel %vm1483, 0, %v1484
  %1486 = vst [vmem:[#allocation3 + $0x20] sm:$0x33] %v1485
  %vm1487 = vcmask 1042433
  %vm1488 = vsmask.f32 2310
  %vm1489 = vmand %vm1487, %vm1488
  %vm1490 = vcmask 1046533
  %vm1491 = vsmask.f32 6422
  %vm1492 = vmand %vm1490, %vm1491
  %vm1493 = vmor %vm1492, %vm1489
  %v1494 = vld [vmem:[#allocation3 + $0x40] sm:$0x66]
  %v1495 = vsel %vm1493, 0, %v1494
  %1496 = vst [vmem:[#allocation3 + $0x40] sm:$0x66] %v1495
  %v1497 = vld [vmem:[%s7 + $0x2] sm:$0x1]
  %v1498 = vld [vmem:[%s7 + $0x3] sm:$0x1]
  %v1499 = vld [vmem:[#allocation3] sm:$0xff]
  %v1500 = vld [vmem:[#allocation3 + $0x8] sm:$0xff]
  %v1501 = vld [vmem:[#allocation3 + $0x10] sm:$0xff]
  %v1502 = vld [vmem:[#allocation3 + $0x18] sm:$0xff]
  %v1503 = vld [vmem:[#allocation3 + $0x20] sm:$0xff]
  %v1504 = vld [vmem:[#allocation3 + $0x28] sm:$0xff]
  %v1505 = vld [vmem:[#allocation3 + $0x30] sm:$0xff]
  %v1506 = vld [vmem:[#allocation3 + $0x38] sm:$0xff]
  %v1507 = vld [vmem:[#allocation3 + $0x40] sm:$0x33]
  %v1508 = vld [vmem:[%s3] sm:$0xff]
  %v1509 = vld [vmem:[%s3 + $0x8] sm:$0xff]
  %v1510 = vld [vmem:[%s3 + $0x10] sm:$0xff]
  %v1511 = vld [vmem:[%s3 + $0x18] sm:$0xff]
  %v1512 = vld [vmem:[%s3 + $0x20] sm:$0xff]
  %v1513 = vld [vmem:[%s3 + $0x28] sm:$0xff]
  %v1514 = vld [vmem:[%s3 + $0x30] sm:$0xff]
  %v1515 = vld [vmem:[%s3 + $0x38] sm:$0xff]
  %v1516 = vld [vmem:[%s3 + $0x40] sm:$0xff]
  %v1517 = vld [vmem:[%s3 + $0x48] sm:$0xff]
  %v1518 = vld [vmem:[%s3 + $0x50] sm:$0xff]
  %v1519 = vld [vmem:[%s3 + $0x58] sm:$0xff]
  %v1520 = vld [vmem:[%s3 + $0x60] sm:$0xff]
  %v1521 = vld [vmem:[%s3 + $0x68] sm:$0xff]
  %v1522 = vld [vmem:[%s3 + $0x70] sm:$0xff]
  %v1523 = vld [vmem:[%s3 + $0x78] sm:$0xff]
  %v1524 = vld [vmem:[%s3 + $0x80] sm:$0xff]
  %v1525 = vld [vmem:[%s3 + $0x88] sm:$0xff]
  %v1526 = vld [vmem:[%s3 + $0x90] sm:$0xff]
  %v1527 = vld [vmem:[%s3 + $0x98] sm:$0xff]
  %v1528 = vld [vmem:[%s3 + $0xa0] sm:$0xff]
  %v1529 = vld [vmem:[%s3 + $0xa8] sm:$0xff]
  %v1530 = vld [vmem:[%s3 + $0xb0] sm:$0xff]
  %v1531 = vld [vmem:[%s3 + $0xb8] sm:$0xff]
  %v1532 = vld [vmem:[%s3 + $0xc0] sm:$0xff]
  %v1533 = vld [vmem:[%s3 + $0xc8] sm:$0xff]
  %v1534 = vld [vmem:[%s3 + $0xd0] sm:$0xff]
  %v1535 = vld [vmem:[%s3 + $0xd8] sm:$0xff]
  %v1536 = vld [vmem:[%s3 + $0xe0] sm:$0xff]
  %v1537 = vld [vmem:[%s3 + $0xe8] sm:$0xff]
  %v1538 = vld [vmem:[%s3 + $0xf0] sm:$0xff]
  %v1539 = vld [vmem:[%s3 + $0xf8] sm:$0xff]
  %s1540 = scalar_lea.vmem %s3, 256
  %v1541 = vld [vmem:[%s1540] sm:$0xff]
  %v1542 = vld [vmem:[%s1540 + $0x8] sm:$0xff]
  %v1543 = vld [vmem:[%s1540 + $0x10] sm:$0xff]
  %v1544 = vld [vmem:[%s1540 + $0x18] sm:$0xff]
  %v1545 = vld [vmem:[%s1540 + $0x20] sm:$0xff]
  %v1546 = vld [vmem:[%s1540 + $0x28] sm:$0xff]
  %v1547 = vld [vmem:[%s1540 + $0x30] sm:$0xff]
  %v1548 = vld [vmem:[%s1540 + $0x38] sm:$0xff]
  %v1549 = vld [vmem:[%s1540 + $0x40] sm:$0xff]
  %v1550 = vld [vmem:[%s1540 + $0x48] sm:$0xff]
  %v1551 = vld [vmem:[%s1540 + $0x50] sm:$0xff]
  %v1552 = vld [vmem:[%s1540 + $0x58] sm:$0xff]
  %v1553 = vld [vmem:[%s1540 + $0x60] sm:$0xff]
  %v1554 = vld [vmem:[%s1540 + $0x68] sm:$0xff]
  %v1555 = vld [vmem:[%s1540 + $0x70] sm:$0xff]
  %v1556 = vld [vmem:[%s1540 + $0x78] sm:$0xff]
  %v1557 = vld [vmem:[%s1540 + $0x80] sm:$0xff]
  %v1558 = vld [vmem:[%s1540 + $0x88] sm:$0xff]
  %v1559 = vld [vmem:[%s1540 + $0x90] sm:$0xff]
  %v1560 = vld [vmem:[%s1540 + $0x98] sm:$0xff]
  %v1561 = vld [vmem:[%s1540 + $0xa0] sm:$0xff]
  %v1562 = vld [vmem:[%s1540 + $0xa8] sm:$0xff]
  %v1563 = vld [vmem:[%s1540 + $0xb0] sm:$0xff]
  %v1564 = vld [vmem:[%s1540 + $0xb8] sm:$0xff]
  %v1565 = vld [vmem:[%s1540 + $0xc0] sm:$0xff]
  %v1566 = vld [vmem:[%s1540 + $0xc8] sm:$0xff]
  %v1567 = vld [vmem:[%s1540 + $0xd0] sm:$0xff]
  %v1568 = vld [vmem:[%s1540 + $0xd8] sm:$0xff]
  %v1569 = vld [vmem:[%s1540 + $0xe0] sm:$0xff]
  %v1570 = vld [vmem:[%s1540 + $0xe8] sm:$0xff]
  %v1571 = vld [vmem:[%s1540 + $0xf0] sm:$0xff]
  %v1572 = vld [vmem:[%s1540 + $0xf8] sm:$0xff]
  %v1582 = vunpack.c.l.b16 %v1499
  %v1583 = vunpack.c.h.b16 %v1499
  %v1584 = vunpack.c.l.b16 %v1500
  %v1585 = vunpack.c.h.b16 %v1500
  %v1586 = vunpack.c.l.b16 %v1501
  %v1587 = vunpack.c.h.b16 %v1501
  %v1588 = vunpack.c.l.b16 %v1502
  %v1589 = vunpack.c.h.b16 %v1502
  %v1590 = vunpack.c.l.b16 %v1503
  %v1591 = vunpack.c.h.b16 %v1503
  %v1592 = vunpack.c.l.b16 %v1504
  %v1593 = vunpack.c.h.b16 %v1504
  %v1594 = vunpack.c.l.b16 %v1505
  %v1595 = vunpack.c.h.b16 %v1505
  %v1596 = vunpack.c.l.b16 %v1506
  %v1597 = vunpack.c.h.b16 %v1506
  %v1598 = vunpack.c.l.b16 %v1507
  %v1599 = vunpack.c.h.b16 %v1507
  %v1600 = vpack.c.b16 %v1584, %v1582
  %v1601 = vpack.c.b16 %v1585, %v1583
  %v1602 = vpack.c.b16 %v1588, %v1586
  %v1603 = vpack.c.b16 %v1589, %v1587
  %v1604 = vpack.c.b16 %v1592, %v1590
  %v1605 = vpack.c.b16 %v1593, %v1591
  %v1606 = vpack.c.b16 %v1596, %v1594
  %v1607 = vpack.c.b16 %v1597, %v1595
  %v1608 = vpack.c.b16 %v1598, %v1598
  %v1609 = vpack.c.b16 %v1599, %v1599
  %v1611 = vshrl.u32 %v1600, 16
  %v1613 = vshll.u32 %v1600, 16
  %v1615 = vrot.slane %v1613, 1
  %v1616 = vor.u32 %v1611, %v1615
  %v1618 = vshll.u32 %v1602, 16
  %v1620 = vrot.slane %v1618, 1
  %v1621 = vsel %vm312, %v1616, %v1620
  %v1623 = vshrl.u32 %v1601, 16
  %v1625 = vshll.u32 %v1601, 16
  %v1627 = vrot.slane %v1625, 1
  %v1628 = vor.u32 %v1623, %v1627
  %v1630 = vshll.u32 %v1603, 16
  %v1632 = vrot.slane %v1630, 1
  %v1633 = vsel %vm312, %v1628, %v1632
  %v1634 = vshrl.u32 %v1602, 16
  %v1636 = vor.u32 %v1634, %v1620
  %v1638 = vshll.u32 %v1604, 16
  %v1640 = vrot.slane %v1638, 1
  %v1641 = vsel %vm312, %v1636, %v1640
  %v1642 = vshrl.u32 %v1603, 16
  %v1644 = vor.u32 %v1642, %v1632
  %v1646 = vshll.u32 %v1605, 16
  %v1648 = vrot.slane %v1646, 1
  %v1649 = vsel %vm312, %v1644, %v1648
  %v1650 = vshrl.u32 %v1604, 16
  %v1652 = vor.u32 %v1650, %v1640
  %v1654 = vshll.u32 %v1606, 16
  %v1656 = vrot.slane %v1654, 1
  %v1657 = vsel %vm312, %v1652, %v1656
  %v1658 = vshrl.u32 %v1605, 16
  %v1660 = vor.u32 %v1658, %v1648
  %v1662 = vshll.u32 %v1607, 16
  %v1664 = vrot.slane %v1662, 1
  %v1665 = vsel %vm312, %v1660, %v1664
  %v1666 = vshrl.u32 %v1606, 16
  %v1668 = vor.u32 %v1666, %v1656
  %v1670 = vshll.u32 %v1608, 16
  %v1672 = vrot.slane %v1670, 1
  %v1673 = vsel %vm312, %v1668, %v1672
  %v1674 = vshrl.u32 %v1607, 16
  %v1676 = vor.u32 %v1674, %v1664
  %v1678 = vshll.u32 %v1609, 16
  %v1680 = vrot.slane %v1678, 1
  %v1681 = vsel %vm312, %v1676, %v1680
  %v1682 = vshrl.u32 %v1608, 16
  %v1684 = vor.u32 %v1682, %v1672
  %v1685 = vshrl.u32 %v1609, 16
  %v1687 = vor.u32 %v1685, %v1680
  %v1730 = vunpack.c.l.b16 %v1541
  %v1731 = vunpack.c.h.b16 %v1541
  %v1732 = vunpack.c.l.b16 %v1542
  %v1733 = vunpack.c.h.b16 %v1542
  %v1734 = vunpack.c.l.b16 %v1543
  %v1735 = vunpack.c.h.b16 %v1543
  %v1736 = vunpack.c.l.b16 %v1544
  %v1737 = vunpack.c.h.b16 %v1544
  %v1738 = vunpack.c.l.b16 %v1545
  %v1739 = vunpack.c.h.b16 %v1545
  %v1740 = vunpack.c.l.b16 %v1546
  %v1741 = vunpack.c.h.b16 %v1546
  %v1742 = vunpack.c.l.b16 %v1547
  %v1743 = vunpack.c.h.b16 %v1547
  %v1744 = vunpack.c.l.b16 %v1548
  %v1745 = vunpack.c.h.b16 %v1548
  %v1746 = vunpack.c.l.b16 %v1549
  %v1747 = vunpack.c.h.b16 %v1549
  %v1748 = vunpack.c.l.b16 %v1550
  %v1749 = vunpack.c.h.b16 %v1550
  %v1750 = vunpack.c.l.b16 %v1551
  %v1751 = vunpack.c.h.b16 %v1551
  %v1752 = vunpack.c.l.b16 %v1552
  %v1753 = vunpack.c.h.b16 %v1552
  %v1754 = vunpack.c.l.b16 %v1553
  %v1755 = vunpack.c.h.b16 %v1553
  %v1756 = vunpack.c.l.b16 %v1554
  %v1757 = vunpack.c.h.b16 %v1554
  %v1758 = vunpack.c.l.b16 %v1555
  %v1759 = vunpack.c.h.b16 %v1555
  %v1760 = vunpack.c.l.b16 %v1556
  %v1761 = vunpack.c.h.b16 %v1556
  %v1762 = vunpack.c.l.b16 %v1557
  %v1763 = vunpack.c.h.b16 %v1557
  %v1764 = vunpack.c.l.b16 %v1558
  %v1765 = vunpack.c.h.b16 %v1558
  %v1766 = vunpack.c.l.b16 %v1559
  %v1767 = vunpack.c.h.b16 %v1559
  %v1768 = vunpack.c.l.b16 %v1560
  %v1769 = vunpack.c.h.b16 %v1560
  %v1770 = vunpack.c.l.b16 %v1561
  %v1771 = vunpack.c.h.b16 %v1561
  %v1772 = vunpack.c.l.b16 %v1562
  %v1773 = vunpack.c.h.b16 %v1562
  %v1774 = vunpack.c.l.b16 %v1563
  %v1775 = vunpack.c.h.b16 %v1563
  %v1776 = vunpack.c.l.b16 %v1564
  %v1777 = vunpack.c.h.b16 %v1564
  %v1778 = vunpack.c.l.b16 %v1565
  %v1779 = vunpack.c.h.b16 %v1565
  %v1780 = vunpack.c.l.b16 %v1566
  %v1781 = vunpack.c.h.b16 %v1566
  %v1782 = vunpack.c.l.b16 %v1567
  %v1783 = vunpack.c.h.b16 %v1567
  %v1784 = vunpack.c.l.b16 %v1568
  %v1785 = vunpack.c.h.b16 %v1568
  %v1786 = vunpack.c.l.b16 %v1569
  %v1787 = vunpack.c.h.b16 %v1569
  %v1788 = vunpack.c.l.b16 %v1570
  %v1789 = vunpack.c.h.b16 %v1570
  %v1790 = vunpack.c.l.b16 %v1571
  %v1791 = vunpack.c.h.b16 %v1571
  %v1792 = vunpack.c.l.b16 %v1572
  %v1793 = vunpack.c.h.b16 %v1572
  %v1794 = vpack.c.b16 %v1732, %v1730
  %v1795 = vpack.c.b16 %v1733, %v1731
  %v1796 = vpack.c.b16 %v1736, %v1734
  %v1797 = vpack.c.b16 %v1737, %v1735
  %v1798 = vpack.c.b16 %v1740, %v1738
  %v1799 = vpack.c.b16 %v1741, %v1739
  %v1800 = vpack.c.b16 %v1744, %v1742
  %v1801 = vpack.c.b16 %v1745, %v1743
  %v1802 = vpack.c.b16 %v1748, %v1746
  %v1803 = vpack.c.b16 %v1749, %v1747
  %v1804 = vpack.c.b16 %v1752, %v1750
  %v1805 = vpack.c.b16 %v1753, %v1751
  %v1806 = vpack.c.b16 %v1756, %v1754
  %v1807 = vpack.c.b16 %v1757, %v1755
  %v1808 = vpack.c.b16 %v1760, %v1758
  %v1809 = vpack.c.b16 %v1761, %v1759
  %v1810 = vpack.c.b16 %v1764, %v1762
  %v1811 = vpack.c.b16 %v1765, %v1763
  %v1812 = vpack.c.b16 %v1768, %v1766
  %v1813 = vpack.c.b16 %v1769, %v1767
  %v1814 = vpack.c.b16 %v1772, %v1770
  %v1815 = vpack.c.b16 %v1773, %v1771
  %v1816 = vpack.c.b16 %v1776, %v1774
  %v1817 = vpack.c.b16 %v1777, %v1775
  %v1818 = vpack.c.b16 %v1780, %v1778
  %v1819 = vpack.c.b16 %v1781, %v1779
  %v1820 = vpack.c.b16 %v1784, %v1782
  %v1821 = vpack.c.b16 %v1785, %v1783
  %v1822 = vpack.c.b16 %v1788, %v1786
  %v1823 = vpack.c.b16 %v1789, %v1787
  %v1824 = vpack.c.b16 %v1792, %v1790
  %v1825 = vpack.c.b16 %v1793, %v1791
  %1858 = vmatprep.subr.bf16.mxu0 %v1809
  %1859 = vmatpush1.bf16.msra.mxu0 %v1808
  %1860 = vmatprep.subr.bf16.mxu0 %v1807
  %1861 = vmatpush1.bf16.msra.mxu0 %v1806
  %1862 = vmatprep.subr.bf16.mxu0 %v1805
  %1863 = vmatpush1.bf16.msra.mxu0 %v1804
  %1864 = vmatprep.subr.bf16.mxu0 %v1803
  %1865 = vmatpush1.bf16.msra.mxu0 %v1802
  %1866 = vmatprep.subr.bf16.mxu0 %v1801
  %1867 = vmatpush1.bf16.msra.mxu0 %v1800
  %1868 = vmatprep.subr.bf16.mxu0 %v1799
  %1869 = vmatpush1.bf16.msra.mxu0 %v1798
  %1870 = vmatprep.subr.bf16.mxu0 %v1797
  %1871 = vmatpush1.bf16.msra.mxu0 %v1796
  %1872 = vmatprep.subr.bf16.mxu0 %v1795
  %1873 = vmatpush1.bf16.msra.mxu0 %v1794
  %1874 = vmatprep.subr.bf16.mxu0 %v1825
  %1875 = vmatpush2.bf16.msra.mxu0 %v1824
  %1876 = vmatprep.subr.bf16.mxu0 %v1823
  %1877 = vmatpush2.bf16.msra.mxu0 %v1822
  %1878 = vmatprep.subr.bf16.mxu0 %v1821
  %1879 = vmatpush2.bf16.msra.mxu0 %v1820
  %1880 = vmatprep.subr.bf16.mxu0 %v1819
  %1881 = vmatpush2.bf16.msra.mxu0 %v1818
  %1882 = vmatprep.subr.bf16.mxu0 %v1817
  %1883 = vmatpush2.bf16.msra.mxu0 %v1816
  %1884 = vmatprep.subr.bf16.mxu0 %v1815
  %1885 = vmatpush2.bf16.msra.mxu0 %v1814
  %1886 = vmatprep.subr.bf16.mxu0 %v1813
  %1887 = vmatpush2.bf16.msra.mxu0 %v1812
  %1888 = vmatprep.subr.bf16.mxu0 %v1811
  %1889 = vmatpush2.bf16.msra.mxu0 %v1810
  %1890 = vmatprep.mubr.bf16.mxu0 %v1633
  %1891 = vmatmul.mubr.bf16.gmra.mxu0 %v1621
  %v1892 = vpop.f32.mrf.mxu0
  %v1893 = vadd.f32 0.0, %v1892
  %v1894 = vpop.f32.mrf.mxu0
  %v1895 = vadd.f32 0.0, %v1894
  %v1896 = vpop.f32.mrf.mxu0
  %v1897 = vadd.f32 0.0, %v1896
  %v1898 = vpop.f32.mrf.mxu0
  %v1899 = vadd.f32 0.0, %v1898
  %1900 = vmatprep.mubr.bf16.mxu0 %v1649
  %1901 = vmatmul.mubr.bf16.gmra.mxu0 %v1641
  %v1902 = vpop.f32.mrf.mxu0
  %v1903 = vadd.f32 0.0, %v1902
  %v1904 = vpop.f32.mrf.mxu0
  %v1905 = vadd.f32 0.0, %v1904
  %v1906 = vpop.f32.mrf.mxu0
  %v1907 = vadd.f32 0.0, %v1906
  %v1908 = vpop.f32.mrf.mxu0
  %v1909 = vadd.f32 0.0, %v1908
  %1910 = vmatprep.mubr.bf16.mxu0 %v1665
  %1911 = vmatmul.mubr.bf16.gmra.mxu0 %v1657
  %v1912 = vpop.f32.mrf.mxu0
  %v1913 = vadd.f32 0.0, %v1912
  %v1914 = vpop.f32.mrf.mxu0
  %v1915 = vadd.f32 0.0, %v1914
  %v1916 = vpop.f32.mrf.mxu0
  %v1917 = vadd.f32 0.0, %v1916
  %v1918 = vpop.f32.mrf.mxu0
  %v1919 = vadd.f32 0.0, %v1918
  %1920 = vmatprep.mubr.bf16.mxu0 %v1681
  %1921 = vmatmul.mubr.bf16.gmra.mxu0 %v1673
  %v1922 = vpop.f32.mrf.mxu0
  %v1923 = vadd.f32 0.0, %v1922
  %v1924 = vpop.f32.mrf.mxu0
  %v1925 = vadd.f32 0.0, %v1924
  %v1926 = vpop.f32.mrf.mxu0
  %v1927 = vadd.f32 0.0, %v1926
  %v1928 = vpop.f32.mrf.mxu0
  %v1929 = vadd.f32 0.0, %v1928
  %1930 = vmatprep.mubr.bf16.mxu0 %v1687
  %1931 = vmatmul.mubr.bf16.gmra.mxu0 %v1684
  %v1932 = vpop.f32.mrf.mxu0
  %v1933 = vadd.f32 0.0, %v1932
  %v1934 = vpop.f32.mrf.mxu0
  %v1935 = vadd.f32 0.0, %v1934
  %v1936 = vpop.f32.mrf.mxu0
  %v1937 = vpop.f32.mrf.mxu0
  %1938 = vdwg.mxu0
  %v1981 = vunpack.c.l.b16 %v1508
  %v1982 = vunpack.c.h.b16 %v1508
  %v1983 = vunpack.c.l.b16 %v1509
  %v1984 = vunpack.c.h.b16 %v1509
  %v1985 = vunpack.c.l.b16 %v1510
  %v1986 = vunpack.c.h.b16 %v1510
  %v1987 = vunpack.c.l.b16 %v1511
  %v1988 = vunpack.c.h.b16 %v1511
  %v1989 = vunpack.c.l.b16 %v1512
  %v1990 = vunpack.c.h.b16 %v1512
  %v1991 = vunpack.c.l.b16 %v1513
  %v1992 = vunpack.c.h.b16 %v1513
  %v1993 = vunpack.c.l.b16 %v1514
  %v1994 = vunpack.c.h.b16 %v1514
  %v1995 = vunpack.c.l.b16 %v1515
  %v1996 = vunpack.c.h.b16 %v1515
  %v1997 = vunpack.c.l.b16 %v1516
  %v1998 = vunpack.c.h.b16 %v1516
  %v1999 = vunpack.c.l.b16 %v1517
  %v2000 = vunpack.c.h.b16 %v1517
  %v2001 = vunpack.c.l.b16 %v1518
  %v2002 = vunpack.c.h.b16 %v1518
  %v2003 = vunpack.c.l.b16 %v1519
  %v2004 = vunpack.c.h.b16 %v1519
  %v2005 = vunpack.c.l.b16 %v1520
  %v2006 = vunpack.c.h.b16 %v1520
  %v2007 = vunpack.c.l.b16 %v1521
  %v2008 = vunpack.c.h.b16 %v1521
  %v2009 = vunpack.c.l.b16 %v1522
  %v2010 = vunpack.c.h.b16 %v1522
  %v2011 = vunpack.c.l.b16 %v1523
  %v2012 = vunpack.c.h.b16 %v1523
  %v2013 = vunpack.c.l.b16 %v1524
  %v2014 = vunpack.c.h.b16 %v1524
  %v2015 = vunpack.c.l.b16 %v1525
  %v2016 = vunpack.c.h.b16 %v1525
  %v2017 = vunpack.c.l.b16 %v1526
  %v2018 = vunpack.c.h.b16 %v1526
  %v2019 = vunpack.c.l.b16 %v1527
  %v2020 = vunpack.c.h.b16 %v1527
  %v2021 = vunpack.c.l.b16 %v1528
  %v2022 = vunpack.c.h.b16 %v1528
  %v2023 = vunpack.c.l.b16 %v1529
  %v2024 = vunpack.c.h.b16 %v1529
  %v2025 = vunpack.c.l.b16 %v1530
  %v2026 = vunpack.c.h.b16 %v1530
  %v2027 = vunpack.c.l.b16 %v1531
  %v2028 = vunpack.c.h.b16 %v1531
  %v2029 = vunpack.c.l.b16 %v1532
  %v2030 = vunpack.c.h.b16 %v1532
  %v2031 = vunpack.c.l.b16 %v1533
  %v2032 = vunpack.c.h.b16 %v1533
  %v2033 = vunpack.c.l.b16 %v1534
  %v2034 = vunpack.c.h.b16 %v1534
  %v2035 = vunpack.c.l.b16 %v1535
  %v2036 = vunpack.c.h.b16 %v1535
  %v2037 = vunpack.c.l.b16 %v1536
  %v2038 = vunpack.c.h.b16 %v1536
  %v2039 = vunpack.c.l.b16 %v1537
  %v2040 = vunpack.c.h.b16 %v1537
  %v2041 = vunpack.c.l.b16 %v1538
  %v2042 = vunpack.c.h.b16 %v1538
  %v2043 = vunpack.c.l.b16 %v1539
  %v2044 = vunpack.c.h.b16 %v1539
  %v2045 = vpack.c.b16 %v1983, %v1981
  %v2046 = vpack.c.b16 %v1984, %v1982
  %v2047 = vpack.c.b16 %v1987, %v1985
  %v2048 = vpack.c.b16 %v1988, %v1986
  %v2049 = vpack.c.b16 %v1991, %v1989
  %v2050 = vpack.c.b16 %v1992, %v1990
  %v2051 = vpack.c.b16 %v1995, %v1993
  %v2052 = vpack.c.b16 %v1996, %v1994
  %v2053 = vpack.c.b16 %v1999, %v1997
  %v2054 = vpack.c.b16 %v2000, %v1998
  %v2055 = vpack.c.b16 %v2003, %v2001
  %v2056 = vpack.c.b16 %v2004, %v2002
  %v2057 = vpack.c.b16 %v2007, %v2005
  %v2058 = vpack.c.b16 %v2008, %v2006
  %v2059 = vpack.c.b16 %v2011, %v2009
  %v2060 = vpack.c.b16 %v2012, %v2010
  %v2061 = vpack.c.b16 %v2015, %v2013
  %v2062 = vpack.c.b16 %v2016, %v2014
  %v2063 = vpack.c.b16 %v2019, %v2017
  %v2064 = vpack.c.b16 %v2020, %v2018
  %v2065 = vpack.c.b16 %v2023, %v2021
  %v2066 = vpack.c.b16 %v2024, %v2022
  %v2067 = vpack.c.b16 %v2027, %v2025
  %v2068 = vpack.c.b16 %v2028, %v2026
  %v2069 = vpack.c.b16 %v2031, %v2029
  %v2070 = vpack.c.b16 %v2032, %v2030
  %v2071 = vpack.c.b16 %v2035, %v2033
  %v2072 = vpack.c.b16 %v2036, %v2034
  %v2073 = vpack.c.b16 %v2039, %v2037
  %v2074 = vpack.c.b16 %v2040, %v2038
  %v2075 = vpack.c.b16 %v2043, %v2041
  %v2076 = vpack.c.b16 %v2044, %v2042
  %2109 = vmatprep.subr.bf16.mxu0 %v2060
  %2110 = vmatpush1.bf16.msra.mxu0 %v2059
  %2111 = vmatprep.subr.bf16.mxu0 %v2058
  %2112 = vmatpush1.bf16.msra.mxu0 %v2057
  %2113 = vmatprep.subr.bf16.mxu0 %v2056
  %2114 = vmatpush1.bf16.msra.mxu0 %v2055
  %2115 = vmatprep.subr.bf16.mxu0 %v2054
  %2116 = vmatpush1.bf16.msra.mxu0 %v2053
  %2117 = vmatprep.subr.bf16.mxu0 %v2052
  %2118 = vmatpush1.bf16.msra.mxu0 %v2051
  %2119 = vmatprep.subr.bf16.mxu0 %v2050
  %2120 = vmatpush1.bf16.msra.mxu0 %v2049
  %2121 = vmatprep.subr.bf16.mxu0 %v2048
  %2122 = vmatpush1.bf16.msra.mxu0 %v2047
  %2123 = vmatprep.subr.bf16.mxu0 %v2046
  %2124 = vmatpush1.bf16.msra.mxu0 %v2045
  %2125 = vmatprep.subr.bf16.mxu0 %v2076
  %2126 = vmatpush2.bf16.msra.mxu0 %v2075
  %2127 = vmatprep.subr.bf16.mxu0 %v2074
  %2128 = vmatpush2.bf16.msra.mxu0 %v2073
  %2129 = vmatprep.subr.bf16.mxu0 %v2072
  %2130 = vmatpush2.bf16.msra.mxu0 %v2071
  %2131 = vmatprep.subr.bf16.mxu0 %v2070
  %2132 = vmatpush2.bf16.msra.mxu0 %v2069
  %2133 = vmatprep.subr.bf16.mxu0 %v2068
  %2134 = vmatpush2.bf16.msra.mxu0 %v2067
  %2135 = vmatprep.subr.bf16.mxu0 %v2066
  %2136 = vmatpush2.bf16.msra.mxu0 %v2065
  %2137 = vmatprep.subr.bf16.mxu0 %v2064
  %2138 = vmatpush2.bf16.msra.mxu0 %v2063
  %2139 = vmatprep.subr.bf16.mxu0 %v2062
  %2140 = vmatpush2.bf16.msra.mxu0 %v2061
  %2141 = vmatprep.mubr.bf16.mxu0 %v1601
  %2142 = vmatmul.mubr.bf16.gmra.mxu0 %v1600
  %v2143 = vpop.f32.mrf.mxu0
  %v2144 = vadd.f32 %v1893, %v2143
  %v2145 = vpop.f32.mrf.mxu0
  %v2146 = vadd.f32 %v1895, %v2145
  %v2147 = vpop.f32.mrf.mxu0
  %v2148 = vadd.f32 %v1897, %v2147
  %v2149 = vpop.f32.mrf.mxu0
  %v2150 = vadd.f32 %v1899, %v2149
  %2151 = vmatprep.mubr.bf16.mxu0 %v1603
  %2152 = vmatmul.mubr.bf16.gmra.mxu0 %v1602
  %v2153 = vpop.f32.mrf.mxu0
  %v2154 = vadd.f32 %v1903, %v2153
  %v2155 = vpop.f32.mrf.mxu0
  %v2156 = vadd.f32 %v1905, %v2155
  %v2157 = vpop.f32.mrf.mxu0
  %v2158 = vadd.f32 %v1907, %v2157
  %v2159 = vpop.f32.mrf.mxu0
  %v2160 = vadd.f32 %v1909, %v2159
  %2161 = vmatprep.mubr.bf16.mxu0 %v1605
  %2162 = vmatmul.mubr.bf16.gmra.mxu0 %v1604
  %v2163 = vpop.f32.mrf.mxu0
  %v2164 = vadd.f32 %v1913, %v2163
  %v2165 = vpop.f32.mrf.mxu0
  %v2166 = vadd.f32 %v1915, %v2165
  %v2167 = vpop.f32.mrf.mxu0
  %v2168 = vadd.f32 %v1917, %v2167
  %v2169 = vpop.f32.mrf.mxu0
  %v2170 = vadd.f32 %v1919, %v2169
  %2171 = vmatprep.mubr.bf16.mxu0 %v1607
  %2172 = vmatmul.mubr.bf16.gmra.mxu0 %v1606
  %v2173 = vpop.f32.mrf.mxu0
  %v2174 = vadd.f32 %v1923, %v2173
  %v2175 = vpop.f32.mrf.mxu0
  %v2176 = vadd.f32 %v1925, %v2175
  %v2177 = vpop.f32.mrf.mxu0
  %v2178 = vadd.f32 %v1927, %v2177
  %v2179 = vpop.f32.mrf.mxu0
  %v2180 = vadd.f32 %v1929, %v2179
  %2181 = vmatprep.mubr.bf16.mxu0 %v1609
  %2182 = vmatmul.mubr.bf16.gmra.mxu0 %v1608
  %v2183 = vpop.f32.mrf.mxu0
  %v2184 = vadd.f32 %v1933, %v2183
  %v2185 = vpop.f32.mrf.mxu0
  %v2186 = vadd.f32 %v1935, %v2185
  %v2187 = vpop.f32.mrf.mxu0
  %v2188 = vpop.f32.mrf.mxu0
  %2189 = vdwg.mxu0
  %v2190 = vld [vmem:[#allocation3] sm:$0xee]
  %v2191 = vld [vmem:[#allocation3 + $0x40] sm:$0x77]
  %s2192 = scalar_lea.vmem %s3, 512
  %v2193 = vld [vmem:[%s2192] sm:$0xff]
  %v2194 = vld [vmem:[%s2192 + $0x8] sm:$0xff]
  %v2195 = vld [vmem:[%s2192 + $0x10] sm:$0xff]
  %v2196 = vld [vmem:[%s2192 + $0x18] sm:$0xff]
  %v2197 = vld [vmem:[%s2192 + $0x20] sm:$0xff]
  %v2198 = vld [vmem:[%s2192 + $0x28] sm:$0xff]
  %v2199 = vld [vmem:[%s2192 + $0x30] sm:$0xff]
  %v2200 = vld [vmem:[%s2192 + $0x38] sm:$0xff]
  %v2201 = vld [vmem:[%s2192 + $0x40] sm:$0xff]
  %v2202 = vld [vmem:[%s2192 + $0x48] sm:$0xff]
  %v2203 = vld [vmem:[%s2192 + $0x50] sm:$0xff]
  %v2204 = vld [vmem:[%s2192 + $0x58] sm:$0xff]
  %v2205 = vld [vmem:[%s2192 + $0x60] sm:$0xff]
  %v2206 = vld [vmem:[%s2192 + $0x68] sm:$0xff]
  %v2207 = vld [vmem:[%s2192 + $0x70] sm:$0xff]
  %v2208 = vld [vmem:[%s2192 + $0x78] sm:$0xff]
  %v2209 = vld [vmem:[%s2192 + $0x80] sm:$0xff]
  %v2210 = vld [vmem:[%s2192 + $0x88] sm:$0xff]
  %v2211 = vld [vmem:[%s2192 + $0x90] sm:$0xff]
  %v2212 = vld [vmem:[%s2192 + $0x98] sm:$0xff]
  %v2213 = vld [vmem:[%s2192 + $0xa0] sm:$0xff]
  %v2214 = vld [vmem:[%s2192 + $0xa8] sm:$0xff]
  %v2215 = vld [vmem:[%s2192 + $0xb0] sm:$0xff]
  %v2216 = vld [vmem:[%s2192 + $0xb8] sm:$0xff]
  %v2217 = vld [vmem:[%s2192 + $0xc0] sm:$0xff]
  %v2218 = vld [vmem:[%s2192 + $0xc8] sm:$0xff]
  %v2219 = vld [vmem:[%s2192 + $0xd0] sm:$0xff]
  %v2220 = vld [vmem:[%s2192 + $0xd8] sm:$0xff]
  %v2221 = vld [vmem:[%s2192 + $0xe0] sm:$0xff]
  %v2222 = vld [vmem:[%s2192 + $0xe8] sm:$0xff]
  %v2223 = vld [vmem:[%s2192 + $0xf0] sm:$0xff]
  %v2224 = vld [vmem:[%s2192 + $0xf8] sm:$0xff]
  %v2227 = vunpack.c.l.b16 %v2190
  %v2228 = vunpack.c.h.b16 %v2190
  %v2229 = vunpack.c.l.b16 %v2191
  %v2230 = vunpack.c.h.b16 %v2191
  %v2231 = vpack.c.b16 %v1584, %v2227
  %v2232 = vpack.c.b16 %v1585, %v2228
  %v2233 = vpack.c.b16 %v2229, %v2229
  %v2234 = vpack.c.b16 %v2230, %v2230
  %v2235 = vrot.slane %v2231, 1
  %v2236 = vrot.slane %v1602, 1
  %v2237 = vsel %vm637, %v2235, %v2236
  %v2238 = vrot.slane %v2232, 1
  %v2239 = vrot.slane %v1603, 1
  %v2240 = vsel %vm637, %v2238, %v2239
  %v2241 = vrot.slane %v1604, 1
  %v2242 = vsel %vm637, %v2236, %v2241
  %v2243 = vrot.slane %v1605, 1
  %v2244 = vsel %vm637, %v2239, %v2243
  %v2245 = vrot.slane %v1606, 1
  %v2246 = vsel %vm637, %v2241, %v2245
  %v2247 = vrot.slane %v1607, 1
  %v2248 = vsel %vm637, %v2243, %v2247
  %v2249 = vrot.slane %v2233, 1
  %v2250 = vsel %vm637, %v2245, %v2249
  %v2251 = vrot.slane %v2234, 1
  %v2252 = vsel %vm637, %v2247, %v2251
  %v2295 = vunpack.c.l.b16 %v2193
  %v2296 = vunpack.c.h.b16 %v2193
  %v2297 = vunpack.c.l.b16 %v2194
  %v2298 = vunpack.c.h.b16 %v2194
  %v2299 = vunpack.c.l.b16 %v2195
  %v2300 = vunpack.c.h.b16 %v2195
  %v2301 = vunpack.c.l.b16 %v2196
  %v2302 = vunpack.c.h.b16 %v2196
  %v2303 = vunpack.c.l.b16 %v2197
  %v2304 = vunpack.c.h.b16 %v2197
  %v2305 = vunpack.c.l.b16 %v2198
  %v2306 = vunpack.c.h.b16 %v2198
  %v2307 = vunpack.c.l.b16 %v2199
  %v2308 = vunpack.c.h.b16 %v2199
  %v2309 = vunpack.c.l.b16 %v2200
  %v2310 = vunpack.c.h.b16 %v2200
  %v2311 = vunpack.c.l.b16 %v2201
  %v2312 = vunpack.c.h.b16 %v2201
  %v2313 = vunpack.c.l.b16 %v2202
  %v2314 = vunpack.c.h.b16 %v2202
  %v2315 = vunpack.c.l.b16 %v2203
  %v2316 = vunpack.c.h.b16 %v2203
  %v2317 = vunpack.c.l.b16 %v2204
  %v2318 = vunpack.c.h.b16 %v2204
  %v2319 = vunpack.c.l.b16 %v2205
  %v2320 = vunpack.c.h.b16 %v2205
  %v2321 = vunpack.c.l.b16 %v2206
  %v2322 = vunpack.c.h.b16 %v2206
  %v2323 = vunpack.c.l.b16 %v2207
  %v2324 = vunpack.c.h.b16 %v2207
  %v2325 = vunpack.c.l.b16 %v2208
  %v2326 = vunpack.c.h.b16 %v2208
  %v2327 = vunpack.c.l.b16 %v2209
  %v2328 = vunpack.c.h.b16 %v2209
  %v2329 = vunpack.c.l.b16 %v2210
  %v2330 = vunpack.c.h.b16 %v2210
  %v2331 = vunpack.c.l.b16 %v2211
  %v2332 = vunpack.c.h.b16 %v2211
  %v2333 = vunpack.c.l.b16 %v2212
  %v2334 = vunpack.c.h.b16 %v2212
  %v2335 = vunpack.c.l.b16 %v2213
  %v2336 = vunpack.c.h.b16 %v2213
  %v2337 = vunpack.c.l.b16 %v2214
  %v2338 = vunpack.c.h.b16 %v2214
  %v2339 = vunpack.c.l.b16 %v2215
  %v2340 = vunpack.c.h.b16 %v2215
  %v2341 = vunpack.c.l.b16 %v2216
  %v2342 = vunpack.c.h.b16 %v2216
  %v2343 = vunpack.c.l.b16 %v2217
  %v2344 = vunpack.c.h.b16 %v2217
  %v2345 = vunpack.c.l.b16 %v2218
  %v2346 = vunpack.c.h.b16 %v2218
  %v2347 = vunpack.c.l.b16 %v2219
  %v2348 = vunpack.c.h.b16 %v2219
  %v2349 = vunpack.c.l.b16 %v2220
  %v2350 = vunpack.c.h.b16 %v2220
  %v2351 = vunpack.c.l.b16 %v2221
  %v2352 = vunpack.c.h.b16 %v2221
  %v2353 = vunpack.c.l.b16 %v2222
  %v2354 = vunpack.c.h.b16 %v2222
  %v2355 = vunpack.c.l.b16 %v2223
  %v2356 = vunpack.c.h.b16 %v2223
  %v2357 = vunpack.c.l.b16 %v2224
  %v2358 = vunpack.c.h.b16 %v2224
  %v2359 = vpack.c.b16 %v2297, %v2295
  %v2360 = vpack.c.b16 %v2298, %v2296
  %v2361 = vpack.c.b16 %v2301, %v2299
  %v2362 = vpack.c.b16 %v2302, %v2300
  %v2363 = vpack.c.b16 %v2305, %v2303
  %v2364 = vpack.c.b16 %v2306, %v2304
  %v2365 = vpack.c.b16 %v2309, %v2307
  %v2366 = vpack.c.b16 %v2310, %v2308
  %v2367 = vpack.c.b16 %v2313, %v2311
  %v2368 = vpack.c.b16 %v2314, %v2312
  %v2369 = vpack.c.b16 %v2317, %v2315
  %v2370 = vpack.c.b16 %v2318, %v2316
  %v2371 = vpack.c.b16 %v2321, %v2319
  %v2372 = vpack.c.b16 %v2322, %v2320
  %v2373 = vpack.c.b16 %v2325, %v2323
  %v2374 = vpack.c.b16 %v2326, %v2324
  %v2375 = vpack.c.b16 %v2329, %v2327
  %v2376 = vpack.c.b16 %v2330, %v2328
  %v2377 = vpack.c.b16 %v2333, %v2331
  %v2378 = vpack.c.b16 %v2334, %v2332
  %v2379 = vpack.c.b16 %v2337, %v2335
  %v2380 = vpack.c.b16 %v2338, %v2336
  %v2381 = vpack.c.b16 %v2341, %v2339
  %v2382 = vpack.c.b16 %v2342, %v2340
  %v2383 = vpack.c.b16 %v2345, %v2343
  %v2384 = vpack.c.b16 %v2346, %v2344
  %v2385 = vpack.c.b16 %v2349, %v2347
  %v2386 = vpack.c.b16 %v2350, %v2348
  %v2387 = vpack.c.b16 %v2353, %v2351
  %v2388 = vpack.c.b16 %v2354, %v2352
  %v2389 = vpack.c.b16 %v2357, %v2355
  %v2390 = vpack.c.b16 %v2358, %v2356
  %2423 = vmatprep.subr.bf16.mxu0 %v2374
  %2424 = vmatpush1.bf16.msra.mxu0 %v2373
  %2425 = vmatprep.subr.bf16.mxu0 %v2372
  %2426 = vmatpush1.bf16.msra.mxu0 %v2371
  %2427 = vmatprep.subr.bf16.mxu0 %v2370
  %2428 = vmatpush1.bf16.msra.mxu0 %v2369
  %2429 = vmatprep.subr.bf16.mxu0 %v2368
  %2430 = vmatpush1.bf16.msra.mxu0 %v2367
  %2431 = vmatprep.subr.bf16.mxu0 %v2366
  %2432 = vmatpush1.bf16.msra.mxu0 %v2365
  %2433 = vmatprep.subr.bf16.mxu0 %v2364
  %2434 = vmatpush1.bf16.msra.mxu0 %v2363
  %2435 = vmatprep.subr.bf16.mxu0 %v2362
  %2436 = vmatpush1.bf16.msra.mxu0 %v2361
  %2437 = vmatprep.subr.bf16.mxu0 %v2360
  %2438 = vmatpush1.bf16.msra.mxu0 %v2359
  %2439 = vmatprep.subr.bf16.mxu0 %v2390
  %2440 = vmatpush2.bf16.msra.mxu0 %v2389
  %2441 = vmatprep.subr.bf16.mxu0 %v2388
  %2442 = vmatpush2.bf16.msra.mxu0 %v2387
  %2443 = vmatprep.subr.bf16.mxu0 %v2386
  %2444 = vmatpush2.bf16.msra.mxu0 %v2385
  %2445 = vmatprep.subr.bf16.mxu0 %v2384
  %2446 = vmatpush2.bf16.msra.mxu0 %v2383
  %2447 = vmatprep.subr.bf16.mxu0 %v2382
  %2448 = vmatpush2.bf16.msra.mxu0 %v2381
  %2449 = vmatprep.subr.bf16.mxu0 %v2380
  %2450 = vmatpush2.bf16.msra.mxu0 %v2379
  %2451 = vmatprep.subr.bf16.mxu0 %v2378
  %2452 = vmatpush2.bf16.msra.mxu0 %v2377
  %2453 = vmatprep.subr.bf16.mxu0 %v2376
  %2454 = vmatpush2.bf16.msra.mxu0 %v2375
  %2455 = vmatprep.mubr.bf16.mxu0 %v2240
  %2456 = vmatmul.mubr.bf16.gmra.mxu0 %v2237
  %v2457 = vpop.f32.mrf.mxu0
  %v2458 = vadd.f32 0.0, %v2457
  %v2459 = vpop.f32.mrf.mxu0
  %v2460 = vadd.f32 0.0, %v2459
  %v2461 = vpop.f32.mrf.mxu0
  %v2462 = vadd.f32 0.0, %v2461
  %v2463 = vpop.f32.mrf.mxu0
  %v2464 = vadd.f32 0.0, %v2463
  %2465 = vmatprep.mubr.bf16.mxu0 %v2244
  %2466 = vmatmul.mubr.bf16.gmra.mxu0 %v2242
  %v2467 = vpop.f32.mrf.mxu0
  %v2468 = vadd.f32 0.0, %v2467
  %v2469 = vpop.f32.mrf.mxu0
  %v2470 = vadd.f32 0.0, %v2469
  %v2471 = vpop.f32.mrf.mxu0
  %v2472 = vadd.f32 0.0, %v2471
  %v2473 = vpop.f32.mrf.mxu0
  %v2474 = vadd.f32 0.0, %v2473
  %2475 = vmatprep.mubr.bf16.mxu0 %v2248
  %2476 = vmatmul.mubr.bf16.gmra.mxu0 %v2246
  %v2477 = vpop.f32.mrf.mxu0
  %v2478 = vadd.f32 0.0, %v2477
  %v2479 = vpop.f32.mrf.mxu0
  %v2480 = vadd.f32 0.0, %v2479
  %v2481 = vpop.f32.mrf.mxu0
  %v2482 = vadd.f32 0.0, %v2481
  %v2483 = vpop.f32.mrf.mxu0
  %v2484 = vadd.f32 0.0, %v2483
  %2485 = vmatprep.mubr.bf16.mxu0 %v2252
  %2486 = vmatmul.mubr.bf16.gmra.mxu0 %v2250
  %v2487 = vpop.f32.mrf.mxu0
  %v2488 = vadd.f32 0.0, %v2487
  %v2489 = vpop.f32.mrf.mxu0
  %v2490 = vadd.f32 0.0, %v2489
  %v2491 = vpop.f32.mrf.mxu0
  %v2492 = vadd.f32 0.0, %v2491
  %v2493 = vpop.f32.mrf.mxu0
  %v2494 = vadd.f32 0.0, %v2493
  %2495 = vmatprep.mubr.bf16.mxu0 %v2251
  %2496 = vmatmul.mubr.bf16.gmra.mxu0 %v2249
  %v2497 = vpop.f32.mrf.mxu0
  %v2498 = vadd.f32 0.0, %v2497
  %v2499 = vpop.f32.mrf.mxu0
  %v2500 = vadd.f32 0.0, %v2499
  %v2501 = vpop.f32.mrf.mxu0
  %v2502 = vpop.f32.mrf.mxu0
  %2503 = vdwg.mxu0
  %v2504 = vadd.f32 %v2144, %v2458
  %v2505 = vadd.f32 %v2146, %v2460
  %v2506 = vadd.f32 %v2148, %v2462
  %v2507 = vadd.f32 %v2150, %v2464
  %v2508 = vadd.f32 %v2154, %v2468
  %v2509 = vadd.f32 %v2156, %v2470
  %v2510 = vadd.f32 %v2158, %v2472
  %v2511 = vadd.f32 %v2160, %v2474
  %v2512 = vadd.f32 %v2164, %v2478
  %v2513 = vadd.f32 %v2166, %v2480
  %v2514 = vadd.f32 %v2168, %v2482
  %v2515 = vadd.f32 %v2170, %v2484
  %v2516 = vadd.f32 %v2174, %v2488
  %v2517 = vadd.f32 %v2176, %v2490
  %v2518 = vadd.f32 %v2178, %v2492
  %v2519 = vadd.f32 %v2180, %v2494
  %v2520 = vadd.f32 %v2184, %v2498
  %v2521 = vadd.f32 %v2186, %v2500
  %v2522 = vmul.f32 %v2504, %v804
  %v2523 = vmul.f32 %v2505, %v804
  %v2524 = vmul.f32 %v2506, %v809
  %v2525 = vmul.f32 %v2507, %v809
  %v2526 = vmul.f32 %v2508, %v814
  %v2527 = vmul.f32 %v2509, %v814
  %v2528 = vmul.f32 %v2510, %v819
  %v2529 = vmul.f32 %v2511, %v819
  %v2530 = vmul.f32 %v2512, %v824
  %v2531 = vmul.f32 %v2513, %v824
  %v2532 = vmul.f32 %v2514, %v829
  %v2533 = vmul.f32 %v2515, %v829
  %v2534 = vmul.f32 %v2516, %v834
  %v2535 = vmul.f32 %v2517, %v834
  %v2536 = vmul.f32 %v2518, %v839
  %v2537 = vmul.f32 %v2519, %v839
  %v2538 = vmul.f32 %v2520, %v844
  %v2539 = vmul.f32 %v2521, %v844
  %v2540 = vadd.f32 %v2522, %v2524
  %v2541 = vadd.f32 %v2540, %v2526
  %v2542 = vadd.f32 %v2541, %v2528
  %v2543 = vadd.f32 %v2542, %v2530
  %v2544 = vadd.f32 %v2543, %v2532
  %v2545 = vadd.f32 %v2544, %v2534
  %v2546 = vadd.f32 %v2545, %v2536
  %v2547 = vsel %vm871, %v2538, 0.0
  %v2548 = vadd.f32 %v2546, %v2547
  %v2549 = vrot.slane %v2548, 4
  %v2550 = vadd.f32 %v2548, %v2549
  %v2551 = vrot.slane %v2550, 2
  %v2552 = vadd.f32 %v2550, %v2551
  %v2553 = vrot.slane %v2552, 1
  %v2554 = vadd.f32 %v2552, %v2553
  %v2555 = vadd.f32 %v2523, %v2525
  %v2556 = vadd.f32 %v2555, %v2527
  %v2557 = vadd.f32 %v2556, %v2529
  %v2558 = vadd.f32 %v2557, %v2531
  %v2559 = vadd.f32 %v2558, %v2533
  %v2560 = vadd.f32 %v2559, %v2535
  %v2561 = vadd.f32 %v2560, %v2537
  %v2562 = vsel %vm871, %v2539, 0.0
  %v2563 = vadd.f32 %v2561, %v2562
  %v2564 = vrot.slane %v2563, 4
  %v2565 = vadd.f32 %v2563, %v2564
  %v2566 = vrot.slane %v2565, 2
  %v2567 = vadd.f32 %v2565, %v2566
  %v2568 = vrot.slane %v2567, 1
  %v2569 = vadd.f32 %v2567, %v2568
  %v2570 = vmul.f32 %v2522, %v2504
  %v2571 = vmul.f32 %v2523, %v2505
  %v2572 = vmul.f32 %v2524, %v2506
  %v2573 = vmul.f32 %v2525, %v2507
  %v2574 = vmul.f32 %v2526, %v2508
  %v2575 = vmul.f32 %v2527, %v2509
  %v2576 = vmul.f32 %v2528, %v2510
  %v2577 = vmul.f32 %v2529, %v2511
  %v2578 = vmul.f32 %v2530, %v2512
  %v2579 = vmul.f32 %v2531, %v2513
  %v2580 = vmul.f32 %v2532, %v2514
  %v2581 = vmul.f32 %v2533, %v2515
  %v2582 = vmul.f32 %v2534, %v2516
  %v2583 = vmul.f32 %v2535, %v2517
  %v2584 = vmul.f32 %v2536, %v2518
  %v2585 = vmul.f32 %v2537, %v2519
  %v2586 = vmul.f32 %v2538, %v2520
  %v2587 = vmul.f32 %v2539, %v2521
  %v2588 = vadd.f32 %v2570, %v2572
  %v2589 = vadd.f32 %v2588, %v2574
  %v2590 = vadd.f32 %v2589, %v2576
  %v2591 = vadd.f32 %v2590, %v2578
  %v2592 = vadd.f32 %v2591, %v2580
  %v2593 = vadd.f32 %v2592, %v2582
  %v2594 = vadd.f32 %v2593, %v2584
  %v2595 = vsel %vm871, %v2586, 0.0
  %v2596 = vadd.f32 %v2594, %v2595
  %v2597 = vrot.slane %v2596, 4
  %v2598 = vadd.f32 %v2596, %v2597
  %v2599 = vrot.slane %v2598, 2
  %v2600 = vadd.f32 %v2598, %v2599
  %v2601 = vrot.slane %v2600, 1
  %v2602 = vadd.f32 %v2600, %v2601
  %v2603 = vadd.f32 %v2571, %v2573
  %v2604 = vadd.f32 %v2603, %v2575
  %v2605 = vadd.f32 %v2604, %v2577
  %v2606 = vadd.f32 %v2605, %v2579
  %v2607 = vadd.f32 %v2606, %v2581
  %v2608 = vadd.f32 %v2607, %v2583
  %v2609 = vadd.f32 %v2608, %v2585
  %v2610 = vsel %vm871, %v2587, 0.0
  %v2611 = vadd.f32 %v2609, %v2610
  %v2612 = vrot.slane %v2611, 4
  %v2613 = vadd.f32 %v2611, %v2612
  %v2614 = vrot.slane %v2613, 2
  %v2615 = vadd.f32 %v2613, %v2614
  %v2616 = vrot.slane %v2615, 1
  %v2617 = vadd.f32 %v2615, %v2616
  %2618 = vmatprep.subr.mxu0 0.0
  %2619 = vmatpush1.msra.mxu0 %v233
  %2620 = vmatprep.subr.mxu0 0.0
  %2621 = vmatpush1.msra.mxu0 %v232
  %2622 = vmatprep.subr.mxu0 0.0
  %2623 = vmatpush1.msra.mxu0 %v231
  %2624 = vmatprep.subr.mxu0 0.0
  %2625 = vmatpush1.msra.mxu0 %v230
  %2626 = vmatprep.subr.mxu0 0.0
  %2627 = vmatpush1.msra.mxu0 %v229
  %2628 = vmatprep.subr.mxu0 0.0
  %2629 = vmatpush1.msra.mxu0 %v228
  %2630 = vmatprep.subr.mxu0 0.0
  %2631 = vmatpush1.msra.mxu0 %v227
  %2632 = vmatprep.subr.mxu0 0.0
  %2633 = vmatpush1.msra.mxu0 %v226
  %2634 = vmatprep.subr.mxu0 0.0
  %2635 = vmatpush1.msra.mxu0 %v225
  %2636 = vmatprep.subr.mxu0 0.0
  %2637 = vmatpush1.msra.mxu0 %v224
  %2638 = vmatprep.subr.mxu0 0.0
  %2639 = vmatpush1.msra.mxu0 %v223
  %2640 = vmatprep.subr.mxu0 0.0
  %2641 = vmatpush1.msra.mxu0 %v222
  %2642 = vmatprep.subr.mxu0 0.0
  %2643 = vmatpush1.msra.mxu0 %v221
  %2644 = vmatprep.subr.mxu0 0.0
  %2645 = vmatpush1.msra.mxu0 %v220
  %2646 = vmatprep.subr.mxu0 0.0
  %2647 = vmatpush1.msra.mxu0 %v219
  %2648 = vmatprep.subr.mxu0 0.0
  %2649 = vmatpush1.msra.mxu0 %v218
  %2650 = vmatprep.subr.mxu0 0.0
  %2651 = vmatpush2.msra.mxu0 %v249
  %2652 = vmatprep.subr.mxu0 0.0
  %2653 = vmatpush2.msra.mxu0 %v248
  %2654 = vmatprep.subr.mxu0 0.0
  %2655 = vmatpush2.msra.mxu0 %v247
  %2656 = vmatprep.subr.mxu0 0.0
  %2657 = vmatpush2.msra.mxu0 %v246
  %2658 = vmatprep.subr.mxu0 0.0
  %2659 = vmatpush2.msra.mxu0 %v245
  %2660 = vmatprep.subr.mxu0 0.0
  %2661 = vmatpush2.msra.mxu0 %v244
  %2662 = vmatprep.subr.mxu0 0.0
  %2663 = vmatpush2.msra.mxu0 %v243
  %2664 = vmatprep.subr.mxu0 0.0
  %2665 = vmatpush2.msra.mxu0 %v242
  %2666 = vmatprep.subr.mxu0 0.0
  %2667 = vmatpush2.msra.mxu0 %v241
  %2668 = vmatprep.subr.mxu0 0.0
  %2669 = vmatpush2.msra.mxu0 %v240
  %2670 = vmatprep.subr.mxu0 0.0
  %2671 = vmatpush2.msra.mxu0 %v239
  %2672 = vmatprep.subr.mxu0 0.0
  %2673 = vmatpush2.msra.mxu0 %v238
  %2674 = vmatprep.subr.mxu0 0.0
  %2675 = vmatpush2.msra.mxu0 %v237
  %2676 = vmatprep.subr.mxu0 0.0
  %2677 = vmatpush2.msra.mxu0 %v236
  %2678 = vmatprep.subr.mxu0 0.0
  %2679 = vmatpush2.msra.mxu0 %v235
  %2680 = vmatprep.subr.mxu0 0.0
  %2681 = vmatpush2.msra.mxu0 %v234
  %2682 = vmatprep.mubr.f32.mxu0 %v2569
  %2683 = vmatmul.mubr.f32.gmra.mxu0 %v2554
  %v2684 = vpop.f32.mrf.mxu0
  %v2685 = vadd.f32 0.0, %v2684
  %v2686 = vpop.f32.mrf.mxu0
  %2687 = vdwg.mxu0
  %v2688 = vmul.f32 %v2685, 0.00048828125
  %2689 = vmatprep.subr.mxu0 0.0
  %2690 = vmatpush1.msra.mxu0 %v233
  %2691 = vmatprep.subr.mxu0 0.0
  %2692 = vmatpush1.msra.mxu0 %v232
  %2693 = vmatprep.subr.mxu0 0.0
  %2694 = vmatpush1.msra.mxu0 %v231
  %2695 = vmatprep.subr.mxu0 0.0
  %2696 = vmatpush1.msra.mxu0 %v230
  %2697 = vmatprep.subr.mxu0 0.0
  %2698 = vmatpush1.msra.mxu0 %v229
  %2699 = vmatprep.subr.mxu0 0.0
  %2700 = vmatpush1.msra.mxu0 %v228
  %2701 = vmatprep.subr.mxu0 0.0
  %2702 = vmatpush1.msra.mxu0 %v227
  %2703 = vmatprep.subr.mxu0 0.0
  %2704 = vmatpush1.msra.mxu0 %v226
  %2705 = vmatprep.subr.mxu0 0.0
  %2706 = vmatpush1.msra.mxu0 %v225
  %2707 = vmatprep.subr.mxu0 0.0
  %2708 = vmatpush1.msra.mxu0 %v224
  %2709 = vmatprep.subr.mxu0 0.0
  %2710 = vmatpush1.msra.mxu0 %v223
  %2711 = vmatprep.subr.mxu0 0.0
  %2712 = vmatpush1.msra.mxu0 %v222
  %2713 = vmatprep.subr.mxu0 0.0
  %2714 = vmatpush1.msra.mxu0 %v221
  %2715 = vmatprep.subr.mxu0 0.0
  %2716 = vmatpush1.msra.mxu0 %v220
  %2717 = vmatprep.subr.mxu0 0.0
  %2718 = vmatpush1.msra.mxu0 %v219
  %2719 = vmatprep.subr.mxu0 0.0
  %2720 = vmatpush1.msra.mxu0 %v218
  %2721 = vmatprep.subr.mxu0 0.0
  %2722 = vmatpush2.msra.mxu0 %v249
  %2723 = vmatprep.subr.mxu0 0.0
  %2724 = vmatpush2.msra.mxu0 %v248
  %2725 = vmatprep.subr.mxu0 0.0
  %2726 = vmatpush2.msra.mxu0 %v247
  %2727 = vmatprep.subr.mxu0 0.0
  %2728 = vmatpush2.msra.mxu0 %v246
  %2729 = vmatprep.subr.mxu0 0.0
  %2730 = vmatpush2.msra.mxu0 %v245
  %2731 = vmatprep.subr.mxu0 0.0
  %2732 = vmatpush2.msra.mxu0 %v244
  %2733 = vmatprep.subr.mxu0 0.0
  %2734 = vmatpush2.msra.mxu0 %v243
  %2735 = vmatprep.subr.mxu0 0.0
  %2736 = vmatpush2.msra.mxu0 %v242
  %2737 = vmatprep.subr.mxu0 0.0
  %2738 = vmatpush2.msra.mxu0 %v241
  %2739 = vmatprep.subr.mxu0 0.0
  %2740 = vmatpush2.msra.mxu0 %v240
  %2741 = vmatprep.subr.mxu0 0.0
  %2742 = vmatpush2.msra.mxu0 %v239
  %2743 = vmatprep.subr.mxu0 0.0
  %2744 = vmatpush2.msra.mxu0 %v238
  %2745 = vmatprep.subr.mxu0 0.0
  %2746 = vmatpush2.msra.mxu0 %v237
  %2747 = vmatprep.subr.mxu0 0.0
  %2748 = vmatpush2.msra.mxu0 %v236
  %2749 = vmatprep.subr.mxu0 0.0
  %2750 = vmatpush2.msra.mxu0 %v235
  %2751 = vmatprep.subr.mxu0 0.0
  %2752 = vmatpush2.msra.mxu0 %v234
  %2753 = vmatprep.mubr.f32.mxu0 %v2617
  %2754 = vmatmul.mubr.f32.gmra.mxu0 %v2602
  %v2755 = vpop.f32.mrf.mxu0
  %v2756 = vadd.f32 0.0, %v2755
  %v2757 = vpop.f32.mrf.mxu0
  %2758 = vdwg.mxu0
  %v2759 = vmul.f32 %v2756, 0.00048828125
  %v2760 = vmul.f32 %v2688, %v2688
  %v2761 = vsub.f32 %v2759, %v2760
  %v2762 = vmax.f32 %v2761, 0.0
  %v2763 = vadd.f32 %v2762, 1e-05
  %v2764 = vrsqrt.pop %v2763
  %v2765 = vmul.f32 %v1497, %v2764
  %v2766 = vmul.f32 %v2688, %v2765
  %v2767 = vsub.f32 %v1498, %v2766
  %v2769 = vsel %vm1093, %v2765, 0
  %2771 = vmatprep.subr.mxu0 0.0
  %2772 = vmatpush1.msra.mxu0 0.0
  %2773 = vmatprep.subr.mxu0 0.0
  %2774 = vmatpush1.msra.mxu0 0.0
  %2775 = vmatprep.subr.mxu0 0.0
  %2776 = vmatpush1.msra.mxu0 0.0
  %2777 = vmatprep.subr.mxu0 0.0
  %2778 = vmatpush1.msra.mxu0 0.0
  %2779 = vmatprep.subr.mxu0 0.0
  %2780 = vmatpush1.msra.mxu0 0.0
  %2781 = vmatprep.subr.mxu0 0.0
  %2782 = vmatpush1.msra.mxu0 0.0
  %2783 = vmatprep.subr.mxu0 0.0
  %2784 = vmatpush1.msra.mxu0 0.0
  %2785 = vmatprep.subr.mxu0 0.0
  %2786 = vmatpush1.msra.mxu0 0.0
  %2787 = vmatprep.subr.mxu0 0.0
  %2788 = vmatpush1.msra.mxu0 0.0
  %2789 = vmatprep.subr.mxu0 0.0
  %2790 = vmatpush1.msra.mxu0 0.0
  %2791 = vmatprep.subr.mxu0 0.0
  %2792 = vmatpush1.msra.mxu0 0.0
  %2793 = vmatprep.subr.mxu0 0.0
  %2794 = vmatpush1.msra.mxu0 0.0
  %2795 = vmatprep.subr.mxu0 0.0
  %2796 = vmatpush1.msra.mxu0 0.0
  %2797 = vmatprep.subr.mxu0 0.0
  %2798 = vmatpush1.msra.mxu0 0.0
  %2799 = vmatprep.subr.mxu0 0.0
  %2800 = vmatpush1.msra.mxu0 0.0
  %2801 = vmatprep.subr.mxu0 %v251
  %2802 = vmatpush1.msra.mxu0 %v250
  %2803 = vmatprep.subr.mxu0 0.0
  %2804 = vmatpush2.msra.mxu0 0.0
  %2805 = vmatprep.subr.mxu0 0.0
  %2806 = vmatpush2.msra.mxu0 0.0
  %2807 = vmatprep.subr.mxu0 0.0
  %2808 = vmatpush2.msra.mxu0 0.0
  %2809 = vmatprep.subr.mxu0 0.0
  %2810 = vmatpush2.msra.mxu0 0.0
  %2811 = vmatprep.subr.mxu0 0.0
  %2812 = vmatpush2.msra.mxu0 0.0
  %2813 = vmatprep.subr.mxu0 0.0
  %2814 = vmatpush2.msra.mxu0 0.0
  %2815 = vmatprep.subr.mxu0 0.0
  %2816 = vmatpush2.msra.mxu0 0.0
  %2817 = vmatprep.subr.mxu0 0.0
  %2818 = vmatpush2.msra.mxu0 0.0
  %2819 = vmatprep.subr.mxu0 0.0
  %2820 = vmatpush2.msra.mxu0 0.0
  %2821 = vmatprep.subr.mxu0 0.0
  %2822 = vmatpush2.msra.mxu0 0.0
  %2823 = vmatprep.subr.mxu0 0.0
  %2824 = vmatpush2.msra.mxu0 0.0
  %2825 = vmatprep.subr.mxu0 0.0
  %2826 = vmatpush2.msra.mxu0 0.0
  %2827 = vmatprep.subr.mxu0 0.0
  %2828 = vmatpush2.msra.mxu0 0.0
  %2829 = vmatprep.subr.mxu0 0.0
  %2830 = vmatpush2.msra.mxu0 0.0
  %2831 = vmatprep.subr.mxu0 0.0
  %2832 = vmatpush2.msra.mxu0 0.0
  %2833 = vmatprep.subr.mxu0 0.0
  %2834 = vmatpush2.msra.mxu0 0.0
  %2835 = vmatprep.mubr.f32.mxu0 0.0
  %2836 = vmatmul.mubr.f32.gmra.mxu0 %v2769
  %v2837 = vpop.f32.mrf.mxu0
  %v2838 = vadd.f32 0.0, %v2837
  %v2839 = vpop.f32.mrf.mxu0
  %v2840 = vadd.f32 0.0, %v2839
  %2841 = vdwg.mxu0
  %v2843 = vsel %vm1093, %v2767, 0
  %2845 = vmatprep.subr.mxu0 0.0
  %2846 = vmatpush1.msra.mxu0 0.0
  %2847 = vmatprep.subr.mxu0 0.0
  %2848 = vmatpush1.msra.mxu0 0.0
  %2849 = vmatprep.subr.mxu0 0.0
  %2850 = vmatpush1.msra.mxu0 0.0
  %2851 = vmatprep.subr.mxu0 0.0
  %2852 = vmatpush1.msra.mxu0 0.0
  %2853 = vmatprep.subr.mxu0 0.0
  %2854 = vmatpush1.msra.mxu0 0.0
  %2855 = vmatprep.subr.mxu0 0.0
  %2856 = vmatpush1.msra.mxu0 0.0
  %2857 = vmatprep.subr.mxu0 0.0
  %2858 = vmatpush1.msra.mxu0 0.0
  %2859 = vmatprep.subr.mxu0 0.0
  %2860 = vmatpush1.msra.mxu0 0.0
  %2861 = vmatprep.subr.mxu0 0.0
  %2862 = vmatpush1.msra.mxu0 0.0
  %2863 = vmatprep.subr.mxu0 0.0
  %2864 = vmatpush1.msra.mxu0 0.0
  %2865 = vmatprep.subr.mxu0 0.0
  %2866 = vmatpush1.msra.mxu0 0.0
  %2867 = vmatprep.subr.mxu0 0.0
  %2868 = vmatpush1.msra.mxu0 0.0
  %2869 = vmatprep.subr.mxu0 0.0
  %2870 = vmatpush1.msra.mxu0 0.0
  %2871 = vmatprep.subr.mxu0 0.0
  %2872 = vmatpush1.msra.mxu0 0.0
  %2873 = vmatprep.subr.mxu0 0.0
  %2874 = vmatpush1.msra.mxu0 0.0
  %2875 = vmatprep.subr.mxu0 %v251
  %2876 = vmatpush1.msra.mxu0 %v250
  %2877 = vmatprep.subr.mxu0 0.0
  %2878 = vmatpush2.msra.mxu0 0.0
  %2879 = vmatprep.subr.mxu0 0.0
  %2880 = vmatpush2.msra.mxu0 0.0
  %2881 = vmatprep.subr.mxu0 0.0
  %2882 = vmatpush2.msra.mxu0 0.0
  %2883 = vmatprep.subr.mxu0 0.0
  %2884 = vmatpush2.msra.mxu0 0.0
  %2885 = vmatprep.subr.mxu0 0.0
  %2886 = vmatpush2.msra.mxu0 0.0
  %2887 = vmatprep.subr.mxu0 0.0
  %2888 = vmatpush2.msra.mxu0 0.0
  %2889 = vmatprep.subr.mxu0 0.0
  %2890 = vmatpush2.msra.mxu0 0.0
  %2891 = vmatprep.subr.mxu0 0.0
  %2892 = vmatpush2.msra.mxu0 0.0
  %2893 = vmatprep.subr.mxu0 0.0
  %2894 = vmatpush2.msra.mxu0 0.0
  %2895 = vmatprep.subr.mxu0 0.0
  %2896 = vmatpush2.msra.mxu0 0.0
  %2897 = vmatprep.subr.mxu0 0.0
  %2898 = vmatpush2.msra.mxu0 0.0
  %2899 = vmatprep.subr.mxu0 0.0
  %2900 = vmatpush2.msra.mxu0 0.0
  %2901 = vmatprep.subr.mxu0 0.0
  %2902 = vmatpush2.msra.mxu0 0.0
  %2903 = vmatprep.subr.mxu0 0.0
  %2904 = vmatpush2.msra.mxu0 0.0
  %2905 = vmatprep.subr.mxu0 0.0
  %2906 = vmatpush2.msra.mxu0 0.0
  %2907 = vmatprep.subr.mxu0 0.0
  %2908 = vmatpush2.msra.mxu0 0.0
  %2909 = vmatprep.mubr.f32.mxu0 0.0
  %2910 = vmatmul.mubr.f32.gmra.mxu0 %v2843
  %v2911 = vpop.f32.mrf.mxu0
  %v2912 = vadd.f32 0.0, %v2911
  %v2913 = vpop.f32.mrf.mxu0
  %v2914 = vadd.f32 0.0, %v2913
  %2915 = vdwg.mxu0
  %v2916 = vlaneseq
  %v2917 = vshrl.u32 %v2916, 7
  %v2918 = vsub.s32 0, %v2917
  %v2919 = vrot.slane %v2838, %v2918
  %v2920 = vlaneseq
  %v2921 = vshrl.u32 %v2920, 7
  %v2922 = vsub.s32 0, %v2921
  %v2923 = vrot.slane %v2840, %v2922
  %v2924 = vmul.f32 %v2504, %v2919
  %v2925 = vmul.f32 %v2505, %v2923
  %v2926 = vmul.f32 %v2506, %v2919
  %v2927 = vmul.f32 %v2507, %v2923
  %v2928 = vmul.f32 %v2508, %v2919
  %v2929 = vmul.f32 %v2509, %v2923
  %v2930 = vmul.f32 %v2510, %v2919
  %v2931 = vmul.f32 %v2511, %v2923
  %v2932 = vmul.f32 %v2512, %v2919
  %v2933 = vmul.f32 %v2513, %v2923
  %v2934 = vmul.f32 %v2514, %v2919
  %v2935 = vmul.f32 %v2515, %v2923
  %v2936 = vmul.f32 %v2516, %v2919
  %v2937 = vmul.f32 %v2517, %v2923
  %v2938 = vmul.f32 %v2518, %v2919
  %v2939 = vmul.f32 %v2519, %v2923
  %v2940 = vmul.f32 %v2520, %v2919
  %v2941 = vmul.f32 %v2521, %v2923
  %v2942 = vlaneseq
  %v2943 = vshrl.u32 %v2942, 7
  %v2944 = vsub.s32 0, %v2943
  %v2945 = vrot.slane %v2912, %v2944
  %v2946 = vlaneseq
  %v2947 = vshrl.u32 %v2946, 7
  %v2948 = vsub.s32 0, %v2947
  %v2949 = vrot.slane %v2914, %v2948
  %v2950 = vadd.f32 %v2924, %v2945
  %v2951 = vadd.f32 %v2925, %v2949
  %v2952 = vadd.f32 %v2926, %v2945
  %v2953 = vadd.f32 %v2927, %v2949
  %v2954 = vadd.f32 %v2928, %v2945
  %v2955 = vadd.f32 %v2929, %v2949
  %v2956 = vadd.f32 %v2930, %v2945
  %v2957 = vadd.f32 %v2931, %v2949
  %v2958 = vadd.f32 %v2932, %v2945
  %v2959 = vadd.f32 %v2933, %v2949
  %v2960 = vadd.f32 %v2934, %v2945
  %v2961 = vadd.f32 %v2935, %v2949
  %v2962 = vadd.f32 %v2936, %v2945
  %v2963 = vadd.f32 %v2937, %v2949
  %v2964 = vadd.f32 %v2938, %v2945
  %v2965 = vadd.f32 %v2939, %v2949
  %v2966 = vadd.f32 %v2940, %v2945
  %v2967 = vadd.f32 %v2941, %v2949
  %v2968 = vmax.f32 %v2950, 0.0
  %v2969 = vmax.f32 %v2951, 0.0
  %v2970 = vmax.f32 %v2952, 0.0
  %v2971 = vmax.f32 %v2953, 0.0
  %v2972 = vmax.f32 %v2954, 0.0
  %v2973 = vmax.f32 %v2955, 0.0
  %v2974 = vmax.f32 %v2956, 0.0
  %v2975 = vmax.f32 %v2957, 0.0
  %v2976 = vmax.f32 %v2958, 0.0
  %v2977 = vmax.f32 %v2959, 0.0
  %v2978 = vmax.f32 %v2960, 0.0
  %v2979 = vmax.f32 %v2961, 0.0
  %v2980 = vmax.f32 %v2962, 0.0
  %v2981 = vmax.f32 %v2963, 0.0
  %v2982 = vmax.f32 %v2964, 0.0
  %v2983 = vmax.f32 %v2965, 0.0
  %v2984 = vmax.f32 %v2966, 0.0
  %v2985 = vmax.f32 %v2967, 0.0
  %2986 = vst [vmem:[%s8] sm:$0xff] %v2968
  %2987 = vst [vmem:[%s8 + $0x8] sm:$0xff] %v2969
  %2988 = vst [vmem:[%s8 + $0x10] sm:$0xff] %v2970
  %2989 = vst [vmem:[%s8 + $0x18] sm:$0xff] %v2971
  %2990 = vst [vmem:[%s8 + $0x20] sm:$0xff] %v2972
  %2991 = vst [vmem:[%s8 + $0x28] sm:$0xff] %v2973
  %2992 = vst [vmem:[%s8 + $0x30] sm:$0xff] %v2974
  %2993 = vst [vmem:[%s8 + $0x38] sm:$0xff] %v2975
  %2994 = vst [vmem:[%s8 + $0x40] sm:$0xff] %v2976
  %2995 = vst [vmem:[%s8 + $0x48] sm:$0xff] %v2977
  %2996 = vst [vmem:[%s8 + $0x50] sm:$0xff] %v2978
  %2997 = vst [vmem:[%s8 + $0x58] sm:$0xff] %v2979
  %2998 = vst [vmem:[%s8 + $0x60] sm:$0xff] %v2980
  %2999 = vst [vmem:[%s8 + $0x68] sm:$0xff] %v2981
  %3000 = vst [vmem:[%s8 + $0x70] sm:$0xff] %v2982
  %3001 = vst [vmem:[%s8 + $0x78] sm:$0xff] %v2983
  %3002 = vst [vmem:[%s8 + $0x80] sm:$0x7] %v2984
  %3003 = vst [vmem:[%s8 + $0x88] sm:$0x7] %v2985
  %v3004 = vlaneseq
  %vm3005 = vcmp.ge.s32.totalorder %v3004, 0
  %vm3006 = vcmp.lt.s32.totalorder %v3004, 256
  %vm3007 = vmand %vm3005, %vm3006
  %s3008 = scalar_lea.vmem %s8, 131
  %3009 = vst.msk [vmem:[%s3008] ss:$8 sm:$0x3] %vm3007, 0.0
  %3010 = vst.msk [vmem:[%s3008] ss:$8 sm:$0x0] %vm3007, 0.0
  // Predicated region
  $region34: #{up_block_forward.1} parent=0 // pred_check
    _
  $region35: #{up_block_forward.1} parent=0 // pred_check_branch
    %3012 = sbr.rel (0) target = $region37
  $region36: #{up_block_forward.1} parent=0 // pred_region
    _
  $region37: #{up_block_forward.1} parent=0 // pred_fallthru
    _
  // Predicated region
  $region38: #{up_block_forward.1} parent=0 // pred_check
    _
  $region39: #{up_block_forward.1} parent=0 // pred_check_branch
    %3014 = sbr.rel (0) target = $region41
  $region40: #{up_block_forward.1} parent=0 // pred_region
    _
  $region41: #{up_block_forward.1} parent=0 // pred_fallthru
    _

</llo_original>
